<compile_context>
chip_gen: v7x
topology: tpu7x:2x2x1
jax: 0.10.0
libtpu: 0.0.40
codegen_flags: <defaults>
</compile_context>

<pallas_src>
from functools import partial

import jax
import jax.numpy as jnp
from jax.experimental import pallas as pl
from jax.experimental.pallas import tpu as pltpu


def _round_up(x, m):
    return ((x + m - 1) // m) * m


def _lane(n):
    return _round_up(max(int(n), 1), 128)


def _vmem_limit_bytes():
    """Per-generation scoped VMEM budget (75% of physical, capped)."""
    try:
        cap = pltpu.get_tpu_info().vmem_capacity_bytes
    except Exception:  # pragma: no cover - conservative fallback (v7x-sized)
        cap = 64 * 1024 * 1024
    return min(int(cap * 0.75), 96 * 1024 * 1024)


def _lstur_news_kernel(x_ref, side_ref, w1_ref, b1_ref, qb_ref, w2_ref,
                       rep_ref, sel_ref, bh_ref, out_ref, *, T):
    """One row-tile of the news encoder.

    x_ref    : (rb, T*D)   bf16  flattened token embeddings (lane dense)
    side_ref : (rb, T+2C)  f32   [ token mask | cat emb | subcat emb ]
    w1_ref   : (T*D, T*H)  bf16  block-diagonal attention projection
    b1_ref   : (1, T*H)    f32   b_att tiled T times
    qb_ref   : (T*H, T)    f32   block query (scores = h @ qb)
    w2_ref   : (T*D, T*E)  bf16  block-diagonal head projection
    rep_ref  : (T, T*E)    f32   alpha -> per-token-broadcast matrix
    sel_ref  : (T*E, E)    f32   sum-over-tokens selector
    bh_ref   : (1, E)      f32   head bias
    out_ref  : (rb, E+2C)  f32   concat([title, cat, subcat])
    """
    x = x_ref[...]                                  # (rb, T*D) bf16 (MXU feed)
    side = side_ref[...]                            # (rb, T+2C) f32
    mask = side[:, :T]                              # (rb, T)
    catsub = side[:, T:]                            # (rb, 2C)

    # ---- additive attention: one lane-dense MXU matmul (K=T*D, N=T*H) ----
    h = jnp.tanh(
        jnp.dot(x, w1_ref[...], preferred_element_type=jnp.float32)
        + b1_ref[...])                              # (rb, T*H) f32

    # per-token scores via the block query matrix (MXU, output (rb, T))
    scores = jnp.dot(h, qb_ref[...], preferred_element_type=jnp.float32)
    scores = jnp.where(mask > 0.0, scores, -1e30)
    scores = scores - jnp.max(scores, axis=-1, keepdims=True)
    p = jnp.exp(scores)
    # divide -> EUP approximate reciprocal + VPU multiply (frees VALU slots)
    p = p * pl.reciprocal(jnp.sum(p, axis=-1, keepdims=True), approx=True)

    # ---- head projection FIRST (bf16 MXU), then pool over tokens ----
    xh = jnp.dot(x, w2_ref[...], preferred_element_type=jnp.float32)   # (rb, T*E)
    arep = jnp.dot(p, rep_ref[...], preferred_element_type=jnp.float32)  # (rb, T*E)
    title = jnp.dot(arep * xh, sel_ref[...],
                    preferred_element_type=jnp.float32) + bh_ref[...]  # (rb, E)

    # ---- concat with pre-gathered category/subcategory embeddings ----
    out_ref[...] = jnp.concatenate([title, catsub], axis=-1).astype(out_ref.dtype)


def lstur_news_encoder(title_emb, title_mask, cat_idxs, subcat_idxs, params,
                       *, row_block=1024):
    """Returns (emb, m) exactly like the PyTorch module (eval mode)."""
    B, N, T, D = title_emb.shape
    H = params['w_att'].shape[1]          # attention hidden (= title_emb_dim)
    E = params['w_head'].shape[1]         # head output (= title_emb_dim)
    C = params['cat_tab'].shape[1]        # cat_emb_dim
    R = B * N
    TD, TH, TE = T * D, T * H, T * E

    # --- dominant HBM feed: lane-dense flattened bf16 slab --------------------
    x = title_emb.reshape(R, TD).astype(jnp.bfloat16)

    # --- block-diagonal / constant operands (built once, tiny) ----------------
    eyeT = jnp.eye(T, dtype=jnp.float32)
    w_att32 = params['w_att'].astype(jnp.float32)
    w_head32 = params['w_head'].astype(jnp.float32)
    w1 = jnp.kron(eyeT, w_att32).astype(jnp.bfloat16)                 # (TD, TH)
    w2 = jnp.kron(eyeT, w_head32).astype(jnp.bfloat16)                # (TD, TE)
    qb = jnp.kron(eyeT, params['q'].astype(jnp.float32).reshape(H, 1))  # (TH, T)
    rep = jnp.kron(eyeT, jnp.ones((1, E), jnp.float32))               # (T, TE)
    sel = jnp.kron(jnp.ones((T, 1), jnp.float32), jnp.eye(E, dtype=jnp.float32))  # (TE, E)
    b1 = jnp.tile(params['b_att'].astype(jnp.float32), (1, T))        # (1, TH)
    bh = params['b_head'].astype(jnp.float32)                         # (1, E)

    # --- merged side slab: [ mask | cat emb | subcat emb ] --------------------
    mask = title_mask.reshape(R, T).astype(jnp.float32)
    cat_e = params['cat_tab'][cat_idxs.reshape(-1)].astype(jnp.float32)
    parts = [mask, cat_e]
    n_cat_feats = C
    if subcat_idxs is not None:
        sub_e = params['sub_tab'][subcat_idxs.reshape(-1)].astype(jnp.float32)
        parts.append(sub_e)
        n_cat_feats = 2 * C
    side = jnp.concatenate(parts, axis=-1)                            # (R, SW)
    SW = T + n_cat_feats
    OUT = E + n_cat_feats

    # --- padded-aware VMEM sizing & row tile selection ------------------------
    vmem_limit = _vmem_limit_bytes()
    per_row = (2 * _lane(TD) * 2           # x tile (bf16), double-buffered
               + 2 * _lane(SW) * 4         # side slab (f32), double-buffered
               + 2 * _lane(OUT) * 4        # output tile (f32), double-buffered
               + 4 * _lane(max(TD, TH, TE)) * 4)   # f32 temporaries h/xh/arep/weighted

    def _const_bytes(rows, cols, itemsize):
        # conservative: assume 2 buffers even where Buffered(1) is honoured
        return _round_up(rows, 8) * _lane(cols) * itemsize * 2

    const_bytes = (_const_bytes(TD, TH, 2) + _const_bytes(1, TH, 4)
                   + _const_bytes(TH, T, 4) + _const_bytes(TD, TE, 2)
                   + _const_bytes(T, TE, 4) + _const_bytes(TE, E, 4)
                   + _const_bytes(1, E, 4))
    budget = int(0.5 * vmem_limit) - const_bytes
    cap_rows = max(8, (budget // per_row) // 8 * 8)
    rb = max(8, (min(int(row_block), int(cap_rows)) // 8) * 8)
    rb = min(rb, _round_up(R, 8))

    # Keep an even number of grid steps when possible (balances v7x's two TCs).
    steps = -(-R // rb)
    if steps == 1 and R > 8:
        rb = _round_up(-(-R // 2), 8)
        steps = -(-R // rb)
    elif steps > 1 and steps % 2 == 1:
        rb2 = _round_up(-(-R // (steps + 1)), 8)
        if rb2 >= 8:
            rb = rb2
            steps = -(-R // rb)
    Rp = steps * rb

    if Rp != R:
        pad = Rp - R
        x = jnp.pad(x, ((0, pad), (0, 0)))
        side = jnp.pad(side, ((0, pad), (0, 0)))   # padded rows: all-zero mask

    grid = (steps,)
    kernel = partial(_lstur_news_kernel, T=T)

    def _run(use_buffered):
        def const_spec(shape):
            if use_buffered:
                return pl.BlockSpec(shape, lambda i: (0, 0),
                                    pipeline_mode=pl.Buffered(1))
            return pl.BlockSpec(shape, lambda i: (0, 0))

        in_specs = [
            pl.BlockSpec((rb, TD), lambda i: (i, 0)),    # x (bf16, lane dense)
            pl.BlockSpec((rb, SW), lambda i: (i, 0)),    # mask | cat | subcat
            const_spec((TD, TH)),                        # w1 (bf16)
            const_spec((1, TH)),                         # b1
            const_spec((TH, T)),                         # qb
            const_spec((TD, TE)),                        # w2 (bf16)
            const_spec((T, TE)),                         # rep
            const_spec((TE, E)),                         # sel
            const_spec((1, E)),                          # bh
        ]
        return pl.pallas_call(
            kernel,
            out_shape=jax.ShapeDtypeStruct((Rp, OUT), jnp.float32),
            grid_spec=pltpu.PrefetchScalarGridSpec(
                num_scalar_prefetch=0,
                grid=grid,
                in_specs=in_specs,
                out_specs=pl.BlockSpec((rb, OUT), lambda i: (i, 0)),
            ),
            compiler_params=pltpu.CompilerParams(
                dimension_semantics=("parallel",),
                vmem_limit_bytes=vmem_limit),
        )(x, side, w1, b1, qb, w2, rep, sel, bh)

    try:
        out = _run(True)
    except Exception:
        # Fallback for jax versions without pipeline_mode / Buffered(1) support.
        out = _run(False)

    emb = out[:R].reshape(B, N, OUT)
    return emb, title_mask


def reference(title_emb, title_mask, cat_idxs, subcat_idxs, p):
    """Pure-JAX reference mirroring the kernel's bf16 casting of MXU feeds."""
    x = title_emb.astype(jnp.bfloat16).astype(jnp.float32)
    w_att = p['w_att'].astype(jnp.bfloat16).astype(jnp.float32)
    w_head = p['w_head'].astype(jnp.bfloat16).astype(jnp.float32)
    h = jnp.tanh(jnp.einsum('bntd,dh->bnth', x, w_att) + p['b_att'][0])
    s = jnp.sum(h * p['q'][0], axis=-1)
    s = jnp.where(title_mask > 0, s, -1e30)
    a = jax.nn.softmax(s, axis=-1)
    pooled = jnp.einsum('bnt,bntd->bnd', a, x)
    title = pooled @ w_head + p['b_head'][0]
    cat = p['cat_tab'][cat_idxs]
    sub = p['sub_tab'][subcat_idxs]
    return jnp.concatenate([title, cat, sub], axis=-1)


if __name__ == "__main__":
    # Small config consistent with the module's __init__
    B, N, T = 2, 8, 8              # batch, news-per-sample, tokens-per-title
    D_BACKBONE = 32                # cfg.d_backbone
    TITLE_EMB = 16                 # cfg.title_emb_dim
    CAT_EMB = 8                    # cfg.cat_emb_dim
    N_CAT, N_SUBCAT = 10, 12       # cfg.n_categories / cfg.n_subcategories

    key = jax.random.PRNGKey(0)
    keys = jax.random.split(key, 12)

    params = {
        'w_att':   0.1 * jax.random.normal(keys[0], (D_BACKBONE, TITLE_EMB), jnp.float32),
        'b_att':   0.1 * jax.random.normal(keys[1], (1, TITLE_EMB), jnp.float32),
        'q':       0.1 * jax.random.normal(keys[2], (1, TITLE_EMB), jnp.float32),
        'w_head':  0.1 * jax.random.normal(keys[3], (D_BACKBONE, TITLE_EMB), jnp.float32),
        'b_head':  0.1 * jax.random.normal(keys[4], (1, TITLE_EMB), jnp.float32),
        'cat_tab': 0.1 * jax.random.normal(keys[5], (N_CAT + 1, CAT_EMB), jnp.float32),
        'sub_tab': 0.1 * jax.random.normal(keys[6], (N_SUBCAT + 1, CAT_EMB), jnp.float32),
    }

    title_emb = jax.random.normal(keys[7], (B, N, T, D_BACKBONE), jnp.float32)
    lengths = jax.random.randint(keys[8], (B, N), 1, T + 1)           # >= 1 valid token
    title_mask = (jnp.arange(T)[None, None, :] < lengths[..., None]).astype(jnp.float32)
    cat_idxs = jax.random.randint(keys[9], (B, N), 0, N_CAT + 1)
    subcat_idxs = jax.random.randint(keys[10], (B, N), 0, N_SUBCAT + 1)

    emb, m = lstur_news_encoder(title_emb, title_mask, cat_idxs, subcat_idxs, params)
    emb = jax.block_until_ready(emb)

    ref = reference(title_emb, title_mask, cat_idxs, subcat_idxs, params)
    assert emb.shape == (B, N, TITLE_EMB + 2 * CAT_EMB), emb.shape
    assert m.shape == title_mask.shape
    max_err = float(jnp.max(jnp.abs(emb - ref)))
    assert jnp.allclose(emb, ref, rtol=1e-2, atol=1e-2), max_err

    print("KERNEL_OK")
</pallas_src>

<mosaic_0001>
module attributes {stable_mosaic.version = 11 : i64} {
  func.func @_lstur_news_kernel(%arg0: i32, %arg1: memref<8x256xbf16, #tpu.memory_space<vmem>>, %arg2: memref<8x24xf32, #tpu.memory_space<vmem>>, %arg3: memref<256x128xbf16, #tpu.memory_space<vmem>>, %arg4: memref<1x128xf32, #tpu.memory_space<vmem>>, %arg5: memref<128x8xf32, #tpu.memory_space<vmem>>, %arg6: memref<256x128xbf16, #tpu.memory_space<vmem>>, %arg7: memref<8x128xf32, #tpu.memory_space<vmem>>, %arg8: memref<128x16xf32, #tpu.memory_space<vmem>>, %arg9: memref<1x16xf32, #tpu.memory_space<vmem>>, %arg10: memref<8x32xf32, #tpu.memory_space<vmem>>) attributes {dimension_semantics = [#tpu.dimension_semantics<parallel>], iteration_bounds = array<i64: 2>, scalar_prefetch = 0 : i64, scratch_operands = 0 : i64, tpu.core_type = #tpu.core_type<tc>, window_params = [{transform_indices = @transform_0, window_bounds = array<i64: 8, 256>}, {transform_indices = @transform_1, window_bounds = array<i64: 8, 24>}, {pipeline_mode = #tpu.pipeline_mode<synchronous>, transform_indices = @transform_2, window_bounds = array<i64: 256, 128>}, {pipeline_mode = #tpu.pipeline_mode<synchronous>, transform_indices = @transform_3, window_bounds = array<i64: 1, 128>}, {pipeline_mode = #tpu.pipeline_mode<synchronous>, transform_indices = @transform_4, window_bounds = array<i64: 128, 8>}, {pipeline_mode = #tpu.pipeline_mode<synchronous>, transform_indices = @transform_5, window_bounds = array<i64: 256, 128>}, {pipeline_mode = #tpu.pipeline_mode<synchronous>, transform_indices = @transform_6, window_bounds = array<i64: 8, 128>}, {pipeline_mode = #tpu.pipeline_mode<synchronous>, transform_indices = @transform_7, window_bounds = array<i64: 128, 16>}, {pipeline_mode = #tpu.pipeline_mode<synchronous>, transform_indices = @transform_8, window_bounds = array<i64: 1, 16>}, {transform_indices = @transform_9, window_bounds = array<i64: 8, 32>}]} {
    %c0 = arith.constant 0 : index
    %c0_0 = arith.constant 0 : index
    %0 = vector.load %arg1[%c0, %c0_0] : memref<8x256xbf16, #tpu.memory_space<vmem>>, vector<8x256xbf16>
    %c0_1 = arith.constant 0 : index
    %c0_2 = arith.constant 0 : index
    %1 = vector.load %arg2[%c0_1, %c0_2] : memref<8x24xf32, #tpu.memory_space<vmem>>, vector<8x24xf32>
    %2 = vector.extract_strided_slice %1 {offsets = [0, 0], sizes = [8, 8], strides = [1, 1]} : vector<8x24xf32> to vector<8x8xf32>
    %3 = vector.extract_strided_slice %1 {offsets = [0, 8], sizes = [8, 16], strides = [1, 1]} : vector<8x24xf32> to vector<8x16xf32>
    %c0_3 = arith.constant 0 : index
    %c0_4 = arith.constant 0 : index
    %4 = vector.load %arg3[%c0_3, %c0_4] : memref<256x128xbf16, #tpu.memory_space<vmem>>, vector<256x128xbf16>
    %cst = arith.constant dense<0.000000e+00> : vector<8x128xf32>
    %5 = tpu.matmul %0, %4, %cst {dimension_numbers = #tpu.dot_dimension_numbers<[1], [0], [0], [1], [0, 0, 1, 1], [], []>} : vector<8x256xbf16>, vector<256x128xbf16>, vector<8x128xf32> -> vector<8x128xf32>
    %c0_5 = arith.constant 0 : index
    %c0_6 = arith.constant 0 : index
    %6 = vector.load %arg4[%c0_5, %c0_6] : memref<1x128xf32, #tpu.memory_space<vmem>>, vector<1x128xf32>
    %7 = vector.broadcast %6 : vector<1x128xf32> to vector<8x128xf32>
    %8 = arith.addf %5, %7 : vector<8x128xf32>
    %9 = math.tanh %8 : vector<8x128xf32>
    %c0_7 = arith.constant 0 : index
    %c0_8 = arith.constant 0 : index
    %10 = vector.load %arg5[%c0_7, %c0_8] : memref<128x8xf32, #tpu.memory_space<vmem>>, vector<128x8xf32>
    %cst_9 = arith.constant dense<0.000000e+00> : vector<8x8xf32>
    %11 = tpu.matmul %9, %10, %cst_9 {dimension_numbers = #tpu.dot_dimension_numbers<[1], [0], [0], [1], [0, 0, 1, 1], [], []>} : vector<8x128xf32>, vector<128x8xf32>, vector<8x8xf32> -> vector<8x8xf32>
    %cst_10 = arith.constant 0.000000e+00 : f32
    %12 = vector.broadcast %cst_10 : f32 to vector<8x8xf32>
    %13 = arith.cmpf ogt, %2, %12 : vector<8x8xf32>
    %cst_11 = arith.constant -1.000000e+30 : f32
    %14 = vector.broadcast %cst_11 : f32 to vector<8x8xf32>
    %15 = arith.select %13, %11, %14 : vector<8x8xi1>, vector<8x8xf32>
    %cst_12 = arith.constant dense<0xFF800000> : vector<8xf32>
    %16 = vector.multi_reduction <maximumf>, %15, %cst_12 [1] : vector<8x8xf32> to vector<8xf32>
    %17 = vector.shape_cast %16 : vector<8xf32> to vector<8x1xf32>
    %18 = vector.broadcast %17 : vector<8x1xf32> to vector<8x8xf32>
    %19 = arith.subf %15, %18 : vector<8x8xf32>
    %20 = math.exp %19 : vector<8x8xf32>
    %cst_13 = arith.constant dense<0.000000e+00> : vector<8xf32>
    %21 = vector.multi_reduction <add>, %20, %cst_13 [1] : vector<8x8xf32> to vector<8xf32>
    %22 = vector.shape_cast %21 : vector<8xf32> to vector<8x1xf32>
    %23 = tpu.reciprocal %22 {approx = true} : vector<8x1xf32> -> vector<8x1xf32>
    %24 = vector.broadcast %23 : vector<8x1xf32> to vector<8x8xf32>
    %25 = arith.mulf %20, %24 : vector<8x8xf32>
    %c0_14 = arith.constant 0 : index
    %c0_15 = arith.constant 0 : index
    %26 = vector.load %arg6[%c0_14, %c0_15] : memref<256x128xbf16, #tpu.memory_space<vmem>>, vector<256x128xbf16>
    %cst_16 = arith.constant dense<0.000000e+00> : vector<8x128xf32>
    %27 = tpu.matmul %0, %26, %cst_16 {dimension_numbers = #tpu.dot_dimension_numbers<[1], [0], [0], [1], [0, 0, 1, 1], [], []>} : vector<8x256xbf16>, vector<256x128xbf16>, vector<8x128xf32> -> vector<8x128xf32>
    %c0_17 = arith.constant 0 : index
    %c0_18 = arith.constant 0 : index
    %28 = vector.load %arg7[%c0_17, %c0_18] : memref<8x128xf32, #tpu.memory_space<vmem>>, vector<8x128xf32>
    %cst_19 = arith.constant dense<0.000000e+00> : vector<8x128xf32>
    %29 = tpu.matmul %25, %28, %cst_19 {dimension_numbers = #tpu.dot_dimension_numbers<[1], [0], [0], [1], [0, 0, 1, 1], [], []>} : vector<8x8xf32>, vector<8x128xf32>, vector<8x128xf32> -> vector<8x128xf32>
    %30 = arith.mulf %29, %27 : vector<8x128xf32>
    %c0_20 = arith.constant 0 : index
    %c0_21 = arith.constant 0 : index
    %31 = vector.load %arg8[%c0_20, %c0_21] : memref<128x16xf32, #tpu.memory_space<vmem>>, vector<128x16xf32>
    %cst_22 = arith.constant dense<0.000000e+00> : vector<8x16xf32>
    %32 = tpu.matmul %30, %31, %cst_22 {dimension_numbers = #tpu.dot_dimension_numbers<[1], [0], [0], [1], [0, 0, 1, 1], [], []>} : vector<8x128xf32>, vector<128x16xf32>, vector<8x16xf32> -> vector<8x16xf32>
    %c0_23 = arith.constant 0 : index
    %c0_24 = arith.constant 0 : index
    %33 = vector.load %arg9[%c0_23, %c0_24] : memref<1x16xf32, #tpu.memory_space<vmem>>, vector<1x16xf32>
    %34 = vector.broadcast %33 : vector<1x16xf32> to vector<8x16xf32>
    %35 = arith.addf %32, %34 : vector<8x16xf32>
    %36 = tpu.concatenate %35, %3 in 1 : vector<8x16xf32>, vector<8x16xf32> -> vector<8x32xf32>
    %c0_25 = arith.constant 0 : index
    %c0_26 = arith.constant 0 : index
    %37 = vector.load %arg10[%c0_25, %c0_26] : memref<8x32xf32, #tpu.memory_space<vmem>>, vector<8x32xf32>
    tpu.vector_store %arg10[%c0_25, %c0_26], %36 {strides = array<i32>} : memref<8x32xf32, #tpu.memory_space<vmem>>, vector<8x32xf32>,
    return
  }
  func.func @transform_0(%arg0: i32) -> (i32, i32) {
    %c0_i32 = arith.constant 0 : i32
    %c0_i32_0 = arith.constant 0 : i32
    return %arg0, %c0_i32 : i32, i32
  }
  func.func @transform_1(%arg0: i32) -> (i32, i32) {
    %c0_i32 = arith.constant 0 : i32
    %c0_i32_0 = arith.constant 0 : i32
    return %arg0, %c0_i32 : i32, i32
  }
  func.func @transform_2(%arg0: i32) -> (i32, i32) {
    %c0_i32 = arith.constant 0 : i32
    %c0_i32_0 = arith.constant 0 : i32
    %c0_i32_1 = arith.constant 0 : i32
    return %c0_i32, %c0_i32_0 : i32, i32
  }
  func.func @transform_3(%arg0: i32) -> (i32, i32) {
    %c0_i32 = arith.constant 0 : i32
    %c0_i32_0 = arith.constant 0 : i32
    %c0_i32_1 = arith.constant 0 : i32
    return %c0_i32, %c0_i32_0 : i32, i32
  }
  func.func @transform_4(%arg0: i32) -> (i32, i32) {
    %c0_i32 = arith.constant 0 : i32
    %c0_i32_0 = arith.constant 0 : i32
    %c0_i32_1 = arith.constant 0 : i32
    return %c0_i32, %c0_i32_0 : i32, i32
  }
  func.func @transform_5(%arg0: i32) -> (i32, i32) {
    %c0_i32 = arith.constant 0 : i32
    %c0_i32_0 = arith.constant 0 : i32
    %c0_i32_1 = arith.constant 0 : i32
    return %c0_i32, %c0_i32_0 : i32, i32
  }
  func.func @transform_6(%arg0: i32) -> (i32, i32) {
    %c0_i32 = arith.constant 0 : i32
    %c0_i32_0 = arith.constant 0 : i32
    %c0_i32_1 = arith.constant 0 : i32
    return %c0_i32, %c0_i32_0 : i32, i32
  }
  func.func @transform_7(%arg0: i32) -> (i32, i32) {
    %c0_i32 = arith.constant 0 : i32
    %c0_i32_0 = arith.constant 0 : i32
    %c0_i32_1 = arith.constant 0 : i32
    return %c0_i32, %c0_i32_0 : i32, i32
  }
  func.func @transform_8(%arg0: i32) -> (i32, i32) {
    %c0_i32 = arith.constant 0 : i32
    %c0_i32_0 = arith.constant 0 : i32
    %c0_i32_1 = arith.constant 0 : i32
    return %c0_i32, %c0_i32_0 : i32, i32
  }
  func.func @transform_9(%arg0: i32) -> (i32, i32) {
    %c0_i32 = arith.constant 0 : i32
    %c0_i32_0 = arith.constant 0 : i32
    return %arg0, %c0_i32 : i32, i32
  }
}

module attributes {stable_mosaic.version = 11 : i64} {
  func.func @_lstur_news_kernel(%arg0: i32, %arg1: memref<8x256xbf16, #tpu.memory_space<vmem>>, %arg2: memref<8x24xf32, #tpu.memory_space<vmem>>, %arg3: memref<256x128xbf16, #tpu.memory_space<vmem>>, %arg4: memref<1x128xf32, #tpu.memory_space<vmem>>, %arg5: memref<128x8xf32, #tpu.memory_space<vmem>>, %arg6: memref<256x128xbf16, #tpu.memory_space<vmem>>, %arg7: memref<8x128xf32, #tpu.memory_space<vmem>>, %arg8: memref<128x16xf32, #tpu.memory_space<vmem>>, %arg9: memref<1x16xf32, #tpu.memory_space<vmem>>, %arg10: memref<8x32xf32, #tpu.memory_space<vmem>>) attributes {dimension_semantics = [#tpu.dimension_semantics<parallel>], iteration_bounds = array<i64: 2>, scalar_prefetch = 0 : i64, scratch_operands = 0 : i64, tpu.core_type = #tpu.core_type<tc>, window_params = [{transform_indices = @transform_0, window_bounds = array<i64: 8, 256>}, {transform_indices = @transform_1, window_bounds = array<i64: 8, 24>}, {pipeline_mode = #tpu.pipeline_mode<synchronous>, transform_indices = @transform_2, window_bounds = array<i64: 256, 128>}, {pipeline_mode = #tpu.pipeline_mode<synchronous>, transform_indices = @transform_3, window_bounds = array<i64: 1, 128>}, {pipeline_mode = #tpu.pipeline_mode<synchronous>, transform_indices = @transform_4, window_bounds = array<i64: 128, 8>}, {pipeline_mode = #tpu.pipeline_mode<synchronous>, transform_indices = @transform_5, window_bounds = array<i64: 256, 128>}, {pipeline_mode = #tpu.pipeline_mode<synchronous>, transform_indices = @transform_6, window_bounds = array<i64: 8, 128>}, {pipeline_mode = #tpu.pipeline_mode<synchronous>, transform_indices = @transform_7, window_bounds = array<i64: 128, 16>}, {pipeline_mode = #tpu.pipeline_mode<synchronous>, transform_indices = @transform_8, window_bounds = array<i64: 1, 16>}, {transform_indices = @transform_9, window_bounds = array<i64: 8, 32>}]} {
    %c0 = arith.constant 0 : index
    %c0_0 = arith.constant 0 : index
    %0 = vector.load %arg1[%c0, %c0_0] : memref<8x256xbf16, #tpu.memory_space<vmem>>, vector<8x256xbf16>
    %c0_1 = arith.constant 0 : index
    %c0_2 = arith.constant 0 : index
    %1 = vector.load %arg2[%c0_1, %c0_2] : memref<8x24xf32, #tpu.memory_space<vmem>>, vector<8x24xf32>
    %2 = vector.extract_strided_slice %1 {offsets = [0, 0], sizes = [8, 8], strides = [1, 1]} : vector<8x24xf32> to vector<8x8xf32>
    %3 = vector.extract_strided_slice %1 {offsets = [0, 8], sizes = [8, 16], strides = [1, 1]} : vector<8x24xf32> to vector<8x16xf32>
    %c0_3 = arith.constant 0 : index
    %c0_4 = arith.constant 0 : index
    %4 = vector.load %arg3[%c0_3, %c0_4] : memref<256x128xbf16, #tpu.memory_space<vmem>>, vector<256x128xbf16>
    %cst = arith.constant dense<0.000000e+00> : vector<8x128xf32>
    %5 = tpu.matmul %0, %4, %cst {dimension_numbers = #tpu.dot_dimension_numbers<[1], [0], [0], [1], [0, 0, 1, 1], [], []>} : vector<8x256xbf16>, vector<256x128xbf16>, vector<8x128xf32> -> vector<8x128xf32>
    %c0_5 = arith.constant 0 : index
    %c0_6 = arith.constant 0 : index
    %6 = vector.load %arg4[%c0_5, %c0_6] : memref<1x128xf32, #tpu.memory_space<vmem>>, vector<1x128xf32>
    %7 = vector.broadcast %6 : vector<1x128xf32> to vector<8x128xf32>
    %8 = arith.addf %5, %7 : vector<8x128xf32>
    %9 = math.tanh %8 : vector<8x128xf32>
    %c0_7 = arith.constant 0 : index
    %c0_8 = arith.constant 0 : index
    %10 = vector.load %arg5[%c0_7, %c0_8] : memref<128x8xf32, #tpu.memory_space<vmem>>, vector<128x8xf32>
    %cst_9 = arith.constant dense<0.000000e+00> : vector<8x8xf32>
    %11 = tpu.matmul %9, %10, %cst_9 {dimension_numbers = #tpu.dot_dimension_numbers<[1], [0], [0], [1], [0, 0, 1, 1], [], []>} : vector<8x128xf32>, vector<128x8xf32>, vector<8x8xf32> -> vector<8x8xf32>
    %cst_10 = arith.constant 0.000000e+00 : f32
    %12 = vector.broadcast %cst_10 : f32 to vector<8x8xf32>
    %13 = arith.cmpf ogt, %2, %12 : vector<8x8xf32>
    %cst_11 = arith.constant -1.000000e+30 : f32
    %14 = vector.broadcast %cst_11 : f32 to vector<8x8xf32>
    %15 = arith.select %13, %11, %14 : vector<8x8xi1>, vector<8x8xf32>
    %cst_12 = arith.constant dense<0xFF800000> : vector<8xf32>
    %16 = vector.multi_reduction <maximumf>, %15, %cst_12 [1] : vector<8x8xf32> to vector<8xf32>
    %17 = vector.shape_cast %16 : vector<8xf32> to vector<8x1xf32>
    %18 = vector.broadcast %17 : vector<8x1xf32> to vector<8x8xf32>
    %19 = arith.subf %15, %18 : vector<8x8xf32>
    %20 = math.exp %19 : vector<8x8xf32>
    %cst_13 = arith.constant dense<0.000000e+00> : vector<8xf32>
    %21 = vector.multi_reduction <add>, %20, %cst_13 [1] : vector<8x8xf32> to vector<8xf32>
    %22 = vector.shape_cast %21 : vector<8xf32> to vector<8x1xf32>
    %23 = tpu.reciprocal %22 {approx = true} : vector<8x1xf32> -> vector<8x1xf32>
    %24 = vector.broadcast %23 : vector<8x1xf32> to vector<8x8xf32>
    %25 = arith.mulf %20, %24 : vector<8x8xf32>
    %c0_14 = arith.constant 0 : index
    %c0_15 = arith.constant 0 : index
    %26 = vector.load %arg6[%c0_14, %c0_15] : memref<256x128xbf16, #tpu.memory_space<vmem>>, vector<256x128xbf16>
    %cst_16 = arith.constant dense<0.000000e+00> : vector<8x128xf32>
    %27 = tpu.matmul %0, %26, %cst_16 {dimension_numbers = #tpu.dot_dimension_numbers<[1], [0], [0], [1], [0, 0, 1, 1], [], []>} : vector<8x256xbf16>, vector<256x128xbf16>, vector<8x128xf32> -> vector<8x128xf32>
    %c0_17 = arith.constant 0 : index
    %c0_18 = arith.constant 0 : index
    %28 = vector.load %arg7[%c0_17, %c0_18] : memref<8x128xf32, #tpu.memory_space<vmem>>, vector<8x128xf32>
    %cst_19 = arith.constant dense<0.000000e+00> : vector<8x128xf32>
    %29 = tpu.matmul %25, %28, %cst_19 {dimension_numbers = #tpu.dot_dimension_numbers<[1], [0], [0], [1], [0, 0, 1, 1], [], []>} : vector<8x8xf32>, vector<8x128xf32>, vector<8x128xf32> -> vector<8x128xf32>
    %30 = arith.mulf %29, %27 : vector<8x128xf32>
    %c0_20 = arith.constant 0 : index
    %c0_21 = arith.constant 0 : index
    %31 = vector.load %arg8[%c0_20, %c0_21] : memref<128x16xf32, #tpu.memory_space<vmem>>, vector<128x16xf32>
    %cst_22 = arith.constant dense<0.000000e+00> : vector<8x16xf32>
    %32 = tpu.matmul %30, %31, %cst_22 {dimension_numbers = #tpu.dot_dimension_numbers<[1], [0], [0], [1], [0, 0, 1, 1], [], []>} : vector<8x128xf32>, vector<128x16xf32>, vector<8x16xf32> -> vector<8x16xf32>
    %c0_23 = arith.constant 0 : index
    %c0_24 = arith.constant 0 : index
    %33 = vector.load %arg9[%c0_23, %c0_24] : memref<1x16xf32, #tpu.memory_space<vmem>>, vector<1x16xf32>
    %34 = vector.broadcast %33 : vector<1x16xf32> to vector<8x16xf32>
    %35 = arith.addf %32, %34 : vector<8x16xf32>
    %36 = tpu.concatenate %35, %3 in 1 : vector<8x16xf32>, vector<8x16xf32> -> vector<8x32xf32>
    %c0_25 = arith.constant 0 : index
    %c0_26 = arith.constant 0 : index
    %37 = vector.load %arg10[%c0_25, %c0_26] : memref<8x32xf32, #tpu.memory_space<vmem>>, vector<8x32xf32>
    tpu.vector_store %arg10[%c0_25, %c0_26], %36 {strides = array<i32>} : memref<8x32xf32, #tpu.memory_space<vmem>>, vector<8x32xf32>,
    return
  }
  func.func @transform_0(%arg0: i32) -> (i32, i32) {
    %c0_i32 = arith.constant 0 : i32
    %c0_i32_0 = arith.constant 0 : i32
    return %arg0, %c0_i32 : i32, i32
  }
  func.func @transform_1(%arg0: i32) -> (i32, i32) {
    %c0_i32 = arith.constant 0 : i32
    %c0_i32_0 = arith.constant 0 : i32
    return %arg0, %c0_i32 : i32, i32
  }
  func.func @transform_2(%arg0: i32) -> (i32, i32) {
    %c0_i32 = arith.constant 0 : i32
    %c0_i32_0 = arith.constant 0 : i32
    %c0_i32_1 = arith.constant 0 : i32
    return %c0_i32, %c0_i32_0 : i32, i32
  }
  func.func @transform_3(%arg0: i32) -> (i32, i32) {
    %c0_i32 = arith.constant 0 : i32
    %c0_i32_0 = arith.constant 0 : i32
    %c0_i32_1 = arith.constant 0 : i32
    return %c0_i32, %c0_i32_0 : i32, i32
  }
  func.func @transform_4(%arg0: i32) -> (i32, i32) {
    %c0_i32 = arith.constant 0 : i32
    %c0_i32_0 = arith.constant 0 : i32
    %c0_i32_1 = arith.constant 0 : i32
    return %c0_i32, %c0_i32_0 : i32, i32
  }
  func.func @transform_5(%arg0: i32) -> (i32, i32) {
    %c0_i32 = arith.constant 0 : i32
    %c0_i32_0 = arith.constant 0 : i32
    %c0_i32_1 = arith.constant 0 : i32
    return %c0_i32, %c0_i32_0 : i32, i32
  }
  func.func @transform_6(%arg0: i32) -> (i32, i32) {
    %c0_i32 = arith.constant 0 : i32
    %c0_i32_0 = arith.constant 0 : i32
    %c0_i32_1 = arith.constant 0 : i32
    return %c0_i32, %c0_i32_0 : i32, i32
  }
  func.func @transform_7(%arg0: i32) -> (i32, i32) {
    %c0_i32 = arith.constant 0 : i32
    %c0_i32_0 = arith.constant 0 : i32
    %c0_i32_1 = arith.constant 0 : i32
    return %c0_i32, %c0_i32_0 : i32, i32
  }
  func.func @transform_8(%arg0: i32) -> (i32, i32) {
    %c0_i32 = arith.constant 0 : i32
    %c0_i32_0 = arith.constant 0 : i32
    %c0_i32_1 = arith.constant 0 : i32
    return %c0_i32, %c0_i32_0 : i32, i32
  }
  func.func @transform_9(%arg0: i32) -> (i32, i32) {
    %c0_i32 = arith.constant 0 : i32
    %c0_i32_0 = arith.constant 0 : i32
    return %arg0, %c0_i32 : i32, i32
  }
}

</mosaic_0001>

<llo_original>
// kernel: tpu_custom_call.1
$region0: #{tpu_custom_call.1}
  #allocation0 [shape = 'u32[]', space=smem, size = 0x4, offset = 0x4, fixed_abs, tag = 'smem constant byte address 0x4 - core index']
  #allocation1 [shape = 'u32[144,128]{1,0:T(1,128)}', space=vmem, size = 0x12000, scoped, tag = 'internal scratch']
  %s0 = inlined_call_operand.hbm [shape: bf16[16,256], index: 0, kind: input, shape index: {}]
  %s1 = inlined_call_operand.hbm [shape: f32[16,24], index: 1, kind: input, shape index: {}]
  %s2 = inlined_call_operand.vmem [shape: bf16[256,128], index: 2, kind: input, shape index: {}]
  %s3 = inlined_call_operand.vmem [shape: f32[1,128], index: 3, kind: input, shape index: {}]
  %s4 = inlined_call_operand.vmem [shape: f32[128,8], index: 4, kind: input, shape index: {}]
  %s5 = inlined_call_operand.vmem [shape: bf16[256,128], index: 5, kind: input, shape index: {}]
  %s6 = inlined_call_operand.vmem [shape: f32[8,128], index: 6, kind: input, shape index: {}]
  %s7 = inlined_call_operand.vmem [shape: f32[128,16], index: 7, kind: input, shape index: {}]
  %s8 = inlined_call_operand.vmem [shape: f32[1,16], index: 8, kind: input, shape index: {}]
  %s9 = inlined_call_operand.hbm [shape: f32[16,32], index: 9, kind: output, shape index: {}]
  %s10 = sld [smem:[#allocation0]]
  $region77: #{tpu_custom_call.1} parent=0
    _
  %s12 = ssub.s32 1, %s10
  %s13 = scalar_select 0, %s12, %s10
  $region1: #{tpu_custom_call.1} parent=0
    #allocation2 [shape = 'u8[8192]{0}', space=vmem, size = 0x2000, scoped, tag = 'input window, operand 0']
    #allocation3 [shape = 's32[2]{0}', space=sflag, size = 0x8, scoped, tag = 'scoped memory for tpu_custom_call.1']
    #allocation4 [shape = 's32[2]{0}', space=sflag, size = 0x8, scoped, tag = 'scoped memory for tpu_custom_call.1']
    #allocation5 [shape = 'u8[8192]{0}', space=vmem, size = 0x2000, scoped, tag = 'input window, operand 1']
    #allocation6 [shape = 's32[2]{0}', space=sflag, size = 0x8, scoped, tag = 'scoped memory for tpu_custom_call.1']
    #allocation7 [shape = 'u8[8192]{0}', space=vmem, size = 0x2000, scoped, tag = 'output window, operand 0']
    %14 = vsyncpa [#allocation3], 0
    %s15 = scalar_lea.sflag [#allocation3], 1
    %16 = vsyncpa %s15, 0
    %17 = vsyncpa [#allocation6], 0
    %s18 = scalar_lea.sflag [#allocation6], 1
    %19 = vsyncpa %s18, 0
    %20 = vsyncpa [#allocation4], 0
    %s21 = scalar_lea.sflag [#allocation4], 1
    %22 = vsyncpa %s21, 0
    loop: start=0, step=1, limit=4
    $region2: #{tpu_custom_call.1} parent=1 // loop_pre_header
      _
    $region3: #{tpu_custom_call.1} parent=1 // loop_header
      %s24 = sphi 0, %s28
      %p25 = scmp.ge.s32.totalorder %s24, 4
      %s34 = sphi 0, %s36
      %s37 = sphi 0, %s34
      %s38 = sphi 0, %s37
      %s54 = sphi 0, %s38
      %s60 = sphi 0, %s62
      %s63 = sphi 0, %s60
      %s64 = sphi 0, %s63
      %s80 = sphi 0, %s64
      %s84 = sphi 0, %s84
      %s86 = sphi 0, %s84
      %s87 = sphi 0, %s86
      %s101 = sphi 0, %s87
      %s105 = sphi 0, %s105
      %s107 = sphi 0, %s105
      %s108 = sphi 0, %s107
      %s122 = sphi 0, %s108
      %s126 = sphi 0, %s126
      %s128 = sphi 0, %s126
      %s129 = sphi 0, %s128
      %s143 = sphi 0, %s129
      %s147 = sphi 0, %s147
      %s149 = sphi 0, %s147
      %s150 = sphi 0, %s149
      %s164 = sphi 0, %s150
      %s168 = sphi 0, %s168
      %s170 = sphi 0, %s168
      %s171 = sphi 0, %s170
      %s185 = sphi 0, %s171
      %s189 = sphi 0, %s189
      %s191 = sphi 0, %s189
      %s192 = sphi 0, %s191
      %s206 = sphi 0, %s192
      %s210 = sphi 0, %s210
      %s212 = sphi 0, %s210
      %s213 = sphi 0, %s212
      %s227 = sphi 0, %s213
      %s233 = sphi 0, %s235
      %s236 = sphi 0, %s233
      %s237 = sphi 0, %s236
      %s253 = sphi 0, %s237
    $region4: #{tpu_custom_call.1} parent=1 // loop_header_branch
      %27 = sbr.rel (%p25) target = $region8
    $region5: #{tpu_custom_call.1} parent=1 // loop_body
      %s29 = ssub.s32 %s24, 1
      %s30 = ssub.s32 %s24, 2
      %s31 = sadd.s32 %s24, 1
      %s32 = ssub.s32 %s24, %s31
      %p33 = scmp.eq.s32.totalorder %s32, 0
      %s35 = sadd.s32 %s34, 1
      %s36 = scalar_select %p33, %s34, %s35
      %p39 = pneg %p33
      %p40 = scmp.eq.s32.totalorder %s24, 1
      %p41 = por %p39, %p40
      %p42 = scmp.ne.s32.totalorder %s34, %s37
      %p43 = scmp.eq.s32.totalorder %s24, 0
      %p44 = por %p42, %p43
      %p45 = scmp.ne.s32.totalorder %s34, %s37
      %p46 = scmp.eq.s32.totalorder %s29, 1
      %p47 = por %p45, %p46
      %p48 = scmp.ne.s32.totalorder %s37, %s38
      %p49 = scmp.eq.s32.totalorder %s29, 0
      %p50 = por %p48, %p49
      %p51 = scmp.ne.s32.totalorder %s37, %s38
      %p52 = scmp.eq.s32.totalorder %s30, 1
      %p53 = por %p51, %p52
      %p55 = scmp.ne.s32.totalorder %s38, %s54
      %p56 = scmp.eq.s32.totalorder %s30, 0
      %p57 = por %p55, %p56
      %s58 = ssub.s32 %s24, %s31
      %p59 = scmp.eq.s32.totalorder %s58, 0
      %s61 = sadd.s32 %s60, 1
      %s62 = scalar_select %p59, %s60, %s61
      %p65 = pneg %p59
      %p66 = scmp.eq.s32.totalorder %s24, 1
      %p67 = por %p65, %p66
      %p68 = scmp.ne.s32.totalorder %s60, %s63
      %p69 = scmp.eq.s32.totalorder %s24, 0
      %p70 = por %p68, %p69
      %p71 = scmp.ne.s32.totalorder %s60, %s63
      %p72 = scmp.eq.s32.totalorder %s29, 1
      %p73 = por %p71, %p72
      %p74 = scmp.ne.s32.totalorder %s63, %s64
      %p75 = scmp.eq.s32.totalorder %s29, 0
      %p76 = por %p74, %p75
      %p77 = scmp.ne.s32.totalorder %s63, %s64
      %p78 = scmp.eq.s32.totalorder %s30, 1
      %p79 = por %p77, %p78
      %p81 = scmp.ne.s32.totalorder %s64, %s80
      %p82 = scmp.eq.s32.totalorder %s30, 0
      %p83 = por %p81, %p82
      %s85 = sadd.s32 %s84, 1
      %p88 = scmp.eq.s32.totalorder %s24, 1
      %p89 = scmp.ne.s32.totalorder %s84, %s86
      %p90 = scmp.eq.s32.totalorder %s24, 0
      %p91 = por %p89, %p90
      %p92 = scmp.ne.s32.totalorder %s84, %s86
      %p93 = scmp.eq.s32.totalorder %s29, 1
      %p94 = por %p92, %p93
      %p95 = scmp.ne.s32.totalorder %s86, %s87
      %p96 = scmp.eq.s32.totalorder %s29, 0
      %p97 = por %p95, %p96
      %p98 = scmp.ne.s32.totalorder %s86, %s87
      %p99 = scmp.eq.s32.totalorder %s30, 1
      %p100 = por %p98, %p99
      %p102 = scmp.ne.s32.totalorder %s87, %s101
      %p103 = scmp.eq.s32.totalorder %s30, 0
      %p104 = por %p102, %p103
      %s106 = sadd.s32 %s105, 1
      %p109 = scmp.eq.s32.totalorder %s24, 1
      %p110 = scmp.ne.s32.totalorder %s105, %s107
      %p111 = scmp.eq.s32.totalorder %s24, 0
      %p112 = por %p110, %p111
      %p113 = scmp.ne.s32.totalorder %s105, %s107
      %p114 = scmp.eq.s32.totalorder %s29, 1
      %p115 = por %p113, %p114
      %p116 = scmp.ne.s32.totalorder %s107, %s108
      %p117 = scmp.eq.s32.totalorder %s29, 0
      %p118 = por %p116, %p117
      %p119 = scmp.ne.s32.totalorder %s107, %s108
      %p120 = scmp.eq.s32.totalorder %s30, 1
      %p121 = por %p119, %p120
      %p123 = scmp.ne.s32.totalorder %s108, %s122
      %p124 = scmp.eq.s32.totalorder %s30, 0
      %p125 = por %p123, %p124
      %s127 = sadd.s32 %s126, 1
      %p130 = scmp.eq.s32.totalorder %s24, 1
      %p131 = scmp.ne.s32.totalorder %s126, %s128
      %p132 = scmp.eq.s32.totalorder %s24, 0
      %p133 = por %p131, %p132
      %p134 = scmp.ne.s32.totalorder %s126, %s128
      %p135 = scmp.eq.s32.totalorder %s29, 1
      %p136 = por %p134, %p135
      %p137 = scmp.ne.s32.totalorder %s128, %s129
      %p138 = scmp.eq.s32.totalorder %s29, 0
      %p139 = por %p137, %p138
      %p140 = scmp.ne.s32.totalorder %s128, %s129
      %p141 = scmp.eq.s32.totalorder %s30, 1
      %p142 = por %p140, %p141
      %p144 = scmp.ne.s32.totalorder %s129, %s143
      %p145 = scmp.eq.s32.totalorder %s30, 0
      %p146 = por %p144, %p145
      %s148 = sadd.s32 %s147, 1
      %p151 = scmp.eq.s32.totalorder %s24, 1
      %p152 = scmp.ne.s32.totalorder %s147, %s149
      %p153 = scmp.eq.s32.totalorder %s24, 0
      %p154 = por %p152, %p153
      %p155 = scmp.ne.s32.totalorder %s147, %s149
      %p156 = scmp.eq.s32.totalorder %s29, 1
      %p157 = por %p155, %p156
      %p158 = scmp.ne.s32.totalorder %s149, %s150
      %p159 = scmp.eq.s32.totalorder %s29, 0
      %p160 = por %p158, %p159
      %p161 = scmp.ne.s32.totalorder %s149, %s150
      %p162 = scmp.eq.s32.totalorder %s30, 1
      %p163 = por %p161, %p162
      %p165 = scmp.ne.s32.totalorder %s150, %s164
      %p166 = scmp.eq.s32.totalorder %s30, 0
      %p167 = por %p165, %p166
      %s169 = sadd.s32 %s168, 1
      %p172 = scmp.eq.s32.totalorder %s24, 1
      %p173 = scmp.ne.s32.totalorder %s168, %s170
      %p174 = scmp.eq.s32.totalorder %s24, 0
      %p175 = por %p173, %p174
      %p176 = scmp.ne.s32.totalorder %s168, %s170
      %p177 = scmp.eq.s32.totalorder %s29, 1
      %p178 = por %p176, %p177
      %p179 = scmp.ne.s32.totalorder %s170, %s171
      %p180 = scmp.eq.s32.totalorder %s29, 0
      %p181 = por %p179, %p180
      %p182 = scmp.ne.s32.totalorder %s170, %s171
      %p183 = scmp.eq.s32.totalorder %s30, 1
      %p184 = por %p182, %p183
      %p186 = scmp.ne.s32.totalorder %s171, %s185
      %p187 = scmp.eq.s32.totalorder %s30, 0
      %p188 = por %p186, %p187
      %s190 = sadd.s32 %s189, 1
      %p193 = scmp.eq.s32.totalorder %s24, 1
      %p194 = scmp.ne.s32.totalorder %s189, %s191
      %p195 = scmp.eq.s32.totalorder %s24, 0
      %p196 = por %p194, %p195
      %p197 = scmp.ne.s32.totalorder %s189, %s191
      %p198 = scmp.eq.s32.totalorder %s29, 1
      %p199 = por %p197, %p198
      %p200 = scmp.ne.s32.totalorder %s191, %s192
      %p201 = scmp.eq.s32.totalorder %s29, 0
      %p202 = por %p200, %p201
      %p203 = scmp.ne.s32.totalorder %s191, %s192
      %p204 = scmp.eq.s32.totalorder %s30, 1
      %p205 = por %p203, %p204
      %p207 = scmp.ne.s32.totalorder %s192, %s206
      %p208 = scmp.eq.s32.totalorder %s30, 0
      %p209 = por %p207, %p208
      %s211 = sadd.s32 %s210, 1
      %p214 = scmp.eq.s32.totalorder %s24, 1
      %p215 = scmp.ne.s32.totalorder %s210, %s212
      %p216 = scmp.eq.s32.totalorder %s24, 0
      %p217 = por %p215, %p216
      %p218 = scmp.ne.s32.totalorder %s210, %s212
      %p219 = scmp.eq.s32.totalorder %s29, 1
      %p220 = por %p218, %p219
      %p221 = scmp.ne.s32.totalorder %s212, %s213
      %p222 = scmp.eq.s32.totalorder %s29, 0
      %p223 = por %p221, %p222
      %p224 = scmp.ne.s32.totalorder %s212, %s213
      %p225 = scmp.eq.s32.totalorder %s30, 1
      %p226 = por %p224, %p225
      %p228 = scmp.ne.s32.totalorder %s213, %s227
      %p229 = scmp.eq.s32.totalorder %s30, 0
      %p230 = por %p228, %p229
      %s231 = ssub.s32 %s24, %s31
      %p232 = scmp.eq.s32.totalorder %s231, 0
      %s234 = sadd.s32 %s233, 1
      %s235 = scalar_select %p232, %s233, %s234
      %p238 = pneg %p232
      %p239 = scmp.eq.s32.totalorder %s24, 1
      %p240 = por %p238, %p239
      %p241 = scmp.ne.s32.totalorder %s233, %s236
      %p242 = scmp.eq.s32.totalorder %s24, 0
      %p243 = por %p241, %p242
      %p244 = scmp.ne.s32.totalorder %s233, %s236
      %p245 = scmp.eq.s32.totalorder %s29, 1
      %p246 = por %p244, %p245
      %p247 = scmp.ne.s32.totalorder %s236, %s237
      %p248 = scmp.eq.s32.totalorder %s29, 0
      %p249 = por %p247, %p248
      %p250 = scmp.ne.s32.totalorder %s236, %s237
      %p251 = scmp.eq.s32.totalorder %s30, 1
      %p252 = por %p250, %p251
      %p254 = scmp.ne.s32.totalorder %s237, %s253
      %p255 = scmp.eq.s32.totalorder %s30, 0
      %p256 = por %p254, %p255
      %p257 = scmp.le.s32.totalorder 1, %s24
      %p258 = scmp.lt.s32.totalorder %s24, 3
      %p259 = pnand %p257, %p258
      %p260 = pneg %p259
      // Predicated region
      $region9: #{tpu_custom_call.1} parent=5 // pred_check
        _
      $region10: #{tpu_custom_call.1} parent=5 // pred_check_branch
        %262 = sbr.rel (%p259) target = $region12
      $region11: #{tpu_custom_call.1} parent=5 // pred_region
        %s263 = ssub.s32 %s24, 1
        // Predicated region
        $region13: #{tpu_custom_call.1} parent=11 // pred_check
          %p264 = pneg %p97
        $region14: #{tpu_custom_call.1} parent=11 // pred_check_branch
          %266 = sbr.rel (%p264) target = $region16
        $region15: #{tpu_custom_call.1} parent=11 // pred_region
          _
        $region16: #{tpu_custom_call.1} parent=11 // pred_fallthru
          _
        // Predicated region
        $region17: #{tpu_custom_call.1} parent=11 // pred_check
          %p267 = pneg %p118
        $region18: #{tpu_custom_call.1} parent=11 // pred_check_branch
          %269 = sbr.rel (%p267) target = $region20
        $region19: #{tpu_custom_call.1} parent=11 // pred_region
          _
        $region20: #{tpu_custom_call.1} parent=11 // pred_fallthru
          _
        // Predicated region
        $region21: #{tpu_custom_call.1} parent=11 // pred_check
          %p270 = pneg %p139
        $region22: #{tpu_custom_call.1} parent=11 // pred_check_branch
          %272 = sbr.rel (%p270) target = $region24
        $region23: #{tpu_custom_call.1} parent=11 // pred_region
          _
        $region24: #{tpu_custom_call.1} parent=11 // pred_fallthru
          _
        // Predicated region
        $region25: #{tpu_custom_call.1} parent=11 // pred_check
          %p273 = pneg %p160
        $region26: #{tpu_custom_call.1} parent=11 // pred_check_branch
          %275 = sbr.rel (%p273) target = $region28
        $region27: #{tpu_custom_call.1} parent=11 // pred_region
          _
        $region28: #{tpu_custom_call.1} parent=11 // pred_fallthru
          _
        // Predicated region
        $region29: #{tpu_custom_call.1} parent=11 // pred_check
          %p276 = pneg %p181
        $region30: #{tpu_custom_call.1} parent=11 // pred_check_branch
          %278 = sbr.rel (%p276) target = $region32
        $region31: #{tpu_custom_call.1} parent=11 // pred_region
          _
        $region32: #{tpu_custom_call.1} parent=11 // pred_fallthru
          _
        // Predicated region
        $region33: #{tpu_custom_call.1} parent=11 // pred_check
          %p279 = pneg %p202
        $region34: #{tpu_custom_call.1} parent=11 // pred_check_branch
          %281 = sbr.rel (%p279) target = $region36
        $region35: #{tpu_custom_call.1} parent=11 // pred_region
          _
        $region36: #{tpu_custom_call.1} parent=11 // pred_fallthru
          _
        // Predicated region
        $region37: #{tpu_custom_call.1} parent=11 // pred_check
          %p282 = pneg %p223
        $region38: #{tpu_custom_call.1} parent=11 // pred_check_branch
          %284 = sbr.rel (%p282) target = $region40
        $region39: #{tpu_custom_call.1} parent=11 // pred_region
          _
        $region40: #{tpu_custom_call.1} parent=11 // pred_fallthru
          _
      $region12: #{tpu_custom_call.1} parent=5 // pred_fallthru
        _
      %p285 = scmp.lt.s32.totalorder %s24, 2
      // Predicated region
      $region41: #{tpu_custom_call.1} parent=5 // pred_check
        %p286 = pneg %p285
      $region42: #{tpu_custom_call.1} parent=5 // pred_check_branch
        %288 = sbr.rel (%p286) target = $region44
      $region43: #{tpu_custom_call.1} parent=5 // pred_region
        // Predicated region
        $region45: #{tpu_custom_call.1} parent=43 // pred_check
          %p289 = pneg %p44
        $region46: #{tpu_custom_call.1} parent=43 // pred_check_branch
          %291 = sbr.rel (%p289) target = $region48
        $region47: #{tpu_custom_call.1} parent=43 // pred_region
          %s292 = sand.u32 %s34, 1
          %s293 = scalar_lea.sflag [#allocation3], %s292
          %s294 = sand.u32 %s34, 1
          %s295 = smul.addr %s294, 8
          %s296 = scalar_lea.vmem [#allocation2], %s295
          %s298 = ssub.s32 128, 128
          %299 = vsyncadd %s293, %s298
          %s300 = smul.addr %s24, 2
          %s301 = smul.addr %s300, 64
          %s302 = scalar_lea.hbm %s0, %s301
          %s304 = sshll.u32 %s296, 4
          %s305 = int_to_ptr.vmem [resolvable:$true] %s304
          %307 = dma.hbm_to_vmem [thread:$0]  %s302, 128, %s305, %s293
        $region48: #{tpu_custom_call.1} parent=43 // pred_fallthru
          _
        // Predicated region
        $region49: #{tpu_custom_call.1} parent=43 // pred_check
          %p308 = pneg %p70
        $region50: #{tpu_custom_call.1} parent=43 // pred_check_branch
          %310 = sbr.rel (%p308) target = $region52
        $region51: #{tpu_custom_call.1} parent=43 // pred_region
          %s311 = sand.u32 %s60, 1
          %s312 = scalar_lea.sflag [#allocation6], %s311
          %s313 = sand.u32 %s60, 1
          %s314 = smul.addr %s313, 8
          %s315 = scalar_lea.vmem [#allocation5], %s314
          %s317 = ssub.s32 128, 128
          %318 = vsyncadd %s312, %s317
          %s319 = smul.addr %s24, 128
          %s320 = scalar_lea.hbm %s1, %s319
          %s322 = sshll.u32 %s315, 4
          %s323 = int_to_ptr.vmem [resolvable:$true] %s322
          %325 = dma.hbm_to_vmem [thread:$0]  %s320, 128, %s323, %s312
        $region52: #{tpu_custom_call.1} parent=43 // pred_fallthru
          _
      $region44: #{tpu_custom_call.1} parent=5 // pred_fallthru
        _
      %p326 = scmp.le.s32.totalorder 1, %s24
      %p327 = scmp.lt.s32.totalorder %s24, 3
      %p328 = pnand %p326, %p327
      %p329 = pneg %p328
      // Predicated region
      $region53: #{tpu_custom_call.1} parent=5 // pred_check
        _
      $region54: #{tpu_custom_call.1} parent=5 // pred_check_branch
        %331 = sbr.rel (%p328) target = $region56
      $region55: #{tpu_custom_call.1} parent=5 // pred_region
        %s332 = ssub.s32 %s24, 1
        %s333 = sand.u32 %s37, 1
        %s334 = scalar_lea.sflag [#allocation3], %s333
        %s335 = sand.u32 %s37, 1
        %s336 = smul.addr %s335, 8
        %s337 = scalar_lea.vmem [#allocation2], %s336
        // Predicated region
        $region57: #{tpu_custom_call.1} parent=55 // pred_check
          %p338 = pneg %p50
        $region58: #{tpu_custom_call.1} parent=55 // pred_check_branch
          %340 = sbr.rel (%p338) target = $region60
        $region59: #{tpu_custom_call.1} parent=55 // pred_region
          %341 = dma.done %s334, 128
        $region60: #{tpu_custom_call.1} parent=55 // pred_fallthru
          _
        %s342 = sand.u32 %s63, 1
        %s343 = scalar_lea.sflag [#allocation6], %s342
        %s344 = sand.u32 %s63, 1
        %s345 = smul.addr %s344, 8
        %s346 = scalar_lea.vmem [#allocation5], %s345
        // Predicated region
        $region61: #{tpu_custom_call.1} parent=55 // pred_check
          %p347 = pneg %p76
        $region62: #{tpu_custom_call.1} parent=55 // pred_check_branch
          %349 = sbr.rel (%p347) target = $region64
        $region63: #{tpu_custom_call.1} parent=55 // pred_region
          %350 = dma.done %s343, 128
        $region64: #{tpu_custom_call.1} parent=55 // pred_fallthru
          _
        %s351 = sand.u32 %s37, 1
        %s352 = scalar_lea.sflag [#allocation3], %s351
        %s353 = sand.u32 %s37, 1
        %s354 = smul.addr %s353, 8
        %s355 = scalar_lea.vmem [#allocation2], %s354
        %p356 = pneg %p50
        %p357 = pneg %p47
        %s358 = sand.u32 %s63, 1
        %s359 = scalar_lea.sflag [#allocation6], %s358
        %s360 = sand.u32 %s63, 1
        %s361 = smul.addr %s360, 8
        %s362 = scalar_lea.vmem [#allocation5], %s361
        %p363 = pneg %p76
        %p364 = pneg %p73
        %p365 = pneg %p97
        %p366 = pneg %p94
        %p367 = pneg %p118
        %p368 = pneg %p115
        %p369 = pneg %p139
        %p370 = pneg %p136
        %p371 = pneg %p160
        %p372 = pneg %p157
        %p373 = pneg %p181
        %p374 = pneg %p178
        %p375 = pneg %p202
        %p376 = pneg %p199
        %p377 = pneg %p223
        %p378 = pneg %p220
        %p379 = pneg %p249
        %p380 = pneg %p246
        %s381 = sand.u32 %s236, 1
        %s382 = scalar_lea.sflag [#allocation4], %s381
        %s383 = sand.u32 %s236, 1
        %s384 = smul.addr %s383, 8
        %s385 = scalar_lea.vmem [#allocation7], %s384
        %v387 = vld [vmem:[%s337] sm:$0xff]
        %v388 = vld [vmem:[%s346] sm:$0xff]
        %v389 = vld [vmem:[%s2] sm:$0xf]
        %v390 = vld [vmem:[%s2 + $0x4] sm:$0xf]
        %v391 = vld [vmem:[%s2 + $0x8] sm:$0xf]
        %v392 = vld [vmem:[%s2 + $0xc] sm:$0xf]
        %v393 = vld [vmem:[%s2 + $0x10] sm:$0xf]
        %v394 = vld [vmem:[%s2 + $0x14] sm:$0xf]
        %v395 = vld [vmem:[%s2 + $0x18] sm:$0xf]
        %v396 = vld [vmem:[%s2 + $0x1c] sm:$0xf]
        %v397 = vld [vmem:[%s2 + $0x20] sm:$0xf]
        %v398 = vld [vmem:[%s2 + $0x24] sm:$0xf]
        %v399 = vld [vmem:[%s2 + $0x28] sm:$0xf]
        %v400 = vld [vmem:[%s2 + $0x2c] sm:$0xf]
        %v401 = vld [vmem:[%s2 + $0x30] sm:$0xf]
        %v402 = vld [vmem:[%s2 + $0x34] sm:$0xf]
        %v403 = vld [vmem:[%s2 + $0x38] sm:$0xf]
        %v404 = vld [vmem:[%s2 + $0x3c] sm:$0xf]
        %v405 = vld [vmem:[%s2 + $0x40] sm:$0xf]
        %v406 = vld [vmem:[%s2 + $0x44] sm:$0xf]
        %v407 = vld [vmem:[%s2 + $0x48] sm:$0xf]
        %v408 = vld [vmem:[%s2 + $0x4c] sm:$0xf]
        %v409 = vld [vmem:[%s2 + $0x50] sm:$0xf]
        %v410 = vld [vmem:[%s2 + $0x54] sm:$0xf]
        %v411 = vld [vmem:[%s2 + $0x58] sm:$0xf]
        %v412 = vld [vmem:[%s2 + $0x5c] sm:$0xf]
        %v413 = vld [vmem:[%s2 + $0x60] sm:$0xf]
        %v414 = vld [vmem:[%s2 + $0x64] sm:$0xf]
        %v415 = vld [vmem:[%s2 + $0x68] sm:$0xf]
        %v416 = vld [vmem:[%s2 + $0x6c] sm:$0xf]
        %v417 = vld [vmem:[%s2 + $0x70] sm:$0xf]
        %v418 = vld [vmem:[%s2 + $0x74] sm:$0xf]
        %v419 = vld [vmem:[%s2 + $0x78] sm:$0xf]
        %v420 = vld [vmem:[%s2 + $0x7c] sm:$0xf]
        %v421 = vld [vmem:[%s3] sm:$0x1]
        %v423 = vlaneseq
        %v424 = vshrl.u32 %v423, 7
        %v425 = vsub.s32 0, %v424
        %v426 = vrot.slane %v421, %v425
        %v429 = vunpack.c.l.b16 %v387
        %v430 = vunpack.c.h.b16 %v387
        %v431 = vpack.c.b16 %v429, %v429
        %v432 = vpack.c.b16 %v430, %v430
        %v467 = vunpack.c.l.b16 %v389
        %v468 = vunpack.c.l.b16 %v390
        %v469 = vunpack.c.l.b16 %v391
        %v470 = vunpack.c.l.b16 %v392
        %v471 = vunpack.c.l.b16 %v393
        %v472 = vunpack.c.l.b16 %v394
        %v473 = vunpack.c.l.b16 %v395
        %v474 = vunpack.c.l.b16 %v396
        %v475 = vunpack.c.l.b16 %v397
        %v476 = vunpack.c.l.b16 %v398
        %v477 = vunpack.c.l.b16 %v399
        %v478 = vunpack.c.l.b16 %v400
        %v479 = vunpack.c.l.b16 %v401
        %v480 = vunpack.c.l.b16 %v402
        %v481 = vunpack.c.l.b16 %v403
        %v482 = vunpack.c.l.b16 %v404
        %v483 = vunpack.c.l.b16 %v405
        %v484 = vunpack.c.l.b16 %v406
        %v485 = vunpack.c.l.b16 %v407
        %v486 = vunpack.c.l.b16 %v408
        %v487 = vunpack.c.l.b16 %v409
        %v488 = vunpack.c.l.b16 %v410
        %v489 = vunpack.c.l.b16 %v411
        %v490 = vunpack.c.l.b16 %v412
        %v491 = vunpack.c.l.b16 %v413
        %v492 = vunpack.c.l.b16 %v414
        %v493 = vunpack.c.l.b16 %v415
        %v494 = vunpack.c.l.b16 %v416
        %v495 = vunpack.c.l.b16 %v417
        %v496 = vunpack.c.l.b16 %v418
        %v497 = vunpack.c.l.b16 %v419
        %v498 = vunpack.c.l.b16 %v420
        %v499 = vpack.c.b16 %v468, %v467
        %v500 = vpack.c.b16 %v470, %v469
        %v501 = vpack.c.b16 %v472, %v471
        %v502 = vpack.c.b16 %v474, %v473
        %v503 = vpack.c.b16 %v476, %v475
        %v504 = vpack.c.b16 %v478, %v477
        %v505 = vpack.c.b16 %v480, %v479
        %v506 = vpack.c.b16 %v482, %v481
        %v507 = vpack.c.b16 %v484, %v483
        %v508 = vpack.c.b16 %v486, %v485
        %v509 = vpack.c.b16 %v488, %v487
        %v510 = vpack.c.b16 %v490, %v489
        %v511 = vpack.c.b16 %v492, %v491
        %v512 = vpack.c.b16 %v494, %v493
        %v513 = vpack.c.b16 %v496, %v495
        %v514 = vpack.c.b16 %v498, %v497
        %531 = vmatprep.subr.bf16.mxu0 0
        %532 = vmatpush1.bf16.msra.mxu0 %v499
        %533 = vmatprep.subr.bf16.mxu0 0
        %534 = vmatpush1.bf16.msra.mxu0 %v500
        %535 = vmatprep.subr.bf16.mxu0 0
        %536 = vmatpush1.bf16.msra.mxu0 %v501
        %537 = vmatprep.subr.bf16.mxu0 0
        %538 = vmatpush1.bf16.msra.mxu0 %v502
        %539 = vmatprep.subr.bf16.mxu0 0
        %540 = vmatpush1.bf16.msra.mxu0 %v503
        %541 = vmatprep.subr.bf16.mxu0 0
        %542 = vmatpush1.bf16.msra.mxu0 %v504
        %543 = vmatprep.subr.bf16.mxu0 0
        %544 = vmatpush1.bf16.msra.mxu0 %v505
        %545 = vmatprep.subr.bf16.mxu0 0
        %546 = vmatpush1.bf16.msra.mxu0 %v506
        %547 = vmatprep.subr.bf16.mxu0 0
        %548 = vmatpush1.bf16.msra.mxu0 %v507
        %549 = vmatprep.subr.bf16.mxu0 0
        %550 = vmatpush1.bf16.msra.mxu0 %v508
        %551 = vmatprep.subr.bf16.mxu0 0
        %552 = vmatpush1.bf16.msra.mxu0 %v509
        %553 = vmatprep.subr.bf16.mxu0 0
        %554 = vmatpush1.bf16.msra.mxu0 %v510
        %555 = vmatprep.subr.bf16.mxu0 0
        %556 = vmatpush1.bf16.msra.mxu0 %v511
        %557 = vmatprep.subr.bf16.mxu0 0
        %558 = vmatpush1.bf16.msra.mxu0 %v512
        %559 = vmatprep.subr.bf16.mxu0 0
        %560 = vmatpush1.bf16.msra.mxu0 %v513
        %561 = vmatprep.subr.bf16.mxu0 0
        %562 = vmatpush1.bf16.msra.mxu0 %v514
        %563 = vmatprep.mubr.bf16.mxu0 %v432
        %564 = vmatmul.mubr.bf16.gmra.mrb[0].mxu0 %v431
        %v565 = vpop.f32.mrb[0].mxu0
        %v566 = vadd.f32 %v426, %v565
        %v567 = vpop.f32.mrb[0].mxu0
        %v568 = vpop.f32.mrb[0].mxu0
        %v569 = vpop.f32.mrb[0].mxu0
        %570 = vdwg.mxu0
        %v571 = vtanh.pop %v566
        %v572 = vld [vmem:[%s4] sm:$0xff]
        %v573 = vld [vmem:[%s4 + $0x8] sm:$0xff]
        %v574 = vld [vmem:[%s4 + $0x10] sm:$0xff]
        %v575 = vld [vmem:[%s4 + $0x18] sm:$0xff]
        %v576 = vld [vmem:[%s4 + $0x20] sm:$0xff]
        %v577 = vld [vmem:[%s4 + $0x28] sm:$0xff]
        %v578 = vld [vmem:[%s4 + $0x30] sm:$0xff]
        %v579 = vld [vmem:[%s4 + $0x38] sm:$0xff]
        %v580 = vld [vmem:[%s4 + $0x40] sm:$0xff]
        %v581 = vld [vmem:[%s4 + $0x48] sm:$0xff]
        %v582 = vld [vmem:[%s4 + $0x50] sm:$0xff]
        %v583 = vld [vmem:[%s4 + $0x58] sm:$0xff]
        %v584 = vld [vmem:[%s4 + $0x60] sm:$0xff]
        %v585 = vld [vmem:[%s4 + $0x68] sm:$0xff]
        %v586 = vld [vmem:[%s4 + $0x70] sm:$0xff]
        %v587 = vld [vmem:[%s4 + $0x78] sm:$0xff]
        %588 = vmatprep.subr.mxu0 0.0
        %589 = vmatpush1.msra.mxu0 %v572
        %590 = vmatprep.subr.mxu0 0.0
        %591 = vmatpush1.msra.mxu0 %v573
        %592 = vmatprep.subr.mxu0 0.0
        %593 = vmatpush1.msra.mxu0 %v574
        %594 = vmatprep.subr.mxu0 0.0
        %595 = vmatpush1.msra.mxu0 %v575
        %596 = vmatprep.subr.mxu0 0.0
        %597 = vmatpush1.msra.mxu0 %v576
        %598 = vmatprep.subr.mxu0 0.0
        %599 = vmatpush1.msra.mxu0 %v577
        %600 = vmatprep.subr.mxu0 0.0
        %601 = vmatpush1.msra.mxu0 %v578
        %602 = vmatprep.subr.mxu0 0.0
        %603 = vmatpush1.msra.mxu0 %v579
        %604 = vmatprep.subr.mxu0 0.0
        %605 = vmatpush1.msra.mxu0 %v580
        %606 = vmatprep.subr.mxu0 0.0
        %607 = vmatpush1.msra.mxu0 %v581
        %608 = vmatprep.subr.mxu0 0.0
        %609 = vmatpush1.msra.mxu0 %v582
        %610 = vmatprep.subr.mxu0 0.0
        %611 = vmatpush1.msra.mxu0 %v583
        %612 = vmatprep.subr.mxu0 0.0
        %613 = vmatpush1.msra.mxu0 %v584
        %614 = vmatprep.subr.mxu0 0.0
        %615 = vmatpush1.msra.mxu0 %v585
        %616 = vmatprep.subr.mxu0 0.0
        %617 = vmatpush1.msra.mxu0 %v586
        %618 = vmatprep.subr.mxu0 0.0
        %619 = vmatpush1.msra.mxu0 %v587
        %620 = vmatprep.subr.mxu0 0.0
        %621 = vmatpush1.msra.mxu0 0.0
        %622 = vmatprep.subr.mxu0 0.0
        %623 = vmatpush1.msra.mxu0 0.0
        %624 = vmatprep.subr.mxu0 0.0
        %625 = vmatpush1.msra.mxu0 0.0
        %626 = vmatprep.subr.mxu0 0.0
        %627 = vmatpush1.msra.mxu0 0.0
        %628 = vmatprep.subr.mxu0 0.0
        %629 = vmatpush1.msra.mxu0 0.0
        %630 = vmatprep.subr.mxu0 0.0
        %631 = vmatpush1.msra.mxu0 0.0
        %632 = vmatprep.subr.mxu0 0.0
        %633 = vmatpush1.msra.mxu0 0.0
        %634 = vmatprep.subr.mxu0 0.0
        %635 = vmatpush1.msra.mxu0 0.0
        %636 = vmatprep.subr.mxu0 0.0
        %637 = vmatpush1.msra.mxu0 0.0
        %638 = vmatprep.subr.mxu0 0.0
        %639 = vmatpush1.msra.mxu0 0.0
        %640 = vmatprep.subr.mxu0 0.0
        %641 = vmatpush1.msra.mxu0 0.0
        %642 = vmatprep.subr.mxu0 0.0
        %643 = vmatpush1.msra.mxu0 0.0
        %644 = vmatprep.subr.mxu0 0.0
        %645 = vmatpush1.msra.mxu0 0.0
        %646 = vmatprep.subr.mxu0 0.0
        %647 = vmatpush1.msra.mxu0 0.0
        %648 = vmatprep.subr.mxu0 0.0
        %649 = vmatpush1.msra.mxu0 0.0
        %650 = vmatprep.subr.mxu0 0.0
        %651 = vmatpush1.msra.mxu0 0.0
        %652 = vmatprep.mubr.f32.mxu0 0.0
        %653 = vmatmul.mubr.f32.gmra.mrb[0].mxu0 %v571
        %v654 = vpop.f32.mrb[0].mxu0
        %v655 = vadd.f32 0.0, %v654
        %v656 = vpop.f32.mrb[0].mxu0
        %657 = vdwg.mxu0
        %vm658 = vcmp.gt.f32.partialorder %v388, 0.0
        %v659 = vsel %vm658, %v655, -1e+30
        %vm660 = vcmask 64512
        %v661 = vsel %vm660, %v659, -inf
        %662 = vmax.xlane.f32.xlu0 %v661
        %v663 = vpop.xlane.xlu0 %662
        %v664 = vsub.f32 %v659, %v663
        %v665 = vmul.f32 %v664, 1.442695
        %v666 = vpow.pop %v665
        %v667 = vsel %vm660, %v666, 0.0
        %668 = vadd.xlane.f32.xlu0 %v667
        %v669 = vpop.xlane.xlu0 %668
        %v670 = vrcp.pop %v669
        %v671 = vmul.f32 %v666, %v670
        %v672 = vld [vmem:[%s5] sm:$0xf]
        %v673 = vld [vmem:[%s5 + $0x4] sm:$0xf]
        %v674 = vld [vmem:[%s5 + $0x8] sm:$0xf]
        %v675 = vld [vmem:[%s5 + $0xc] sm:$0xf]
        %v676 = vld [vmem:[%s5 + $0x10] sm:$0xf]
        %v677 = vld [vmem:[%s5 + $0x14] sm:$0xf]
        %v678 = vld [vmem:[%s5 + $0x18] sm:$0xf]
        %v679 = vld [vmem:[%s5 + $0x1c] sm:$0xf]
        %v680 = vld [vmem:[%s5 + $0x20] sm:$0xf]
        %v681 = vld [vmem:[%s5 + $0x24] sm:$0xf]
        %v682 = vld [vmem:[%s5 + $0x28] sm:$0xf]
        %v683 = vld [vmem:[%s5 + $0x2c] sm:$0xf]
        %v684 = vld [vmem:[%s5 + $0x30] sm:$0xf]
        %v685 = vld [vmem:[%s5 + $0x34] sm:$0xf]
        %v686 = vld [vmem:[%s5 + $0x38] sm:$0xf]
        %v687 = vld [vmem:[%s5 + $0x3c] sm:$0xf]
        %v688 = vld [vmem:[%s5 + $0x40] sm:$0xf]
        %v689 = vld [vmem:[%s5 + $0x44] sm:$0xf]
        %v690 = vld [vmem:[%s5 + $0x48] sm:$0xf]
        %v691 = vld [vmem:[%s5 + $0x4c] sm:$0xf]
        %v692 = vld [vmem:[%s5 + $0x50] sm:$0xf]
        %v693 = vld [vmem:[%s5 + $0x54] sm:$0xf]
        %v694 = vld [vmem:[%s5 + $0x58] sm:$0xf]
        %v695 = vld [vmem:[%s5 + $0x5c] sm:$0xf]
        %v696 = vld [vmem:[%s5 + $0x60] sm:$0xf]
        %v697 = vld [vmem:[%s5 + $0x64] sm:$0xf]
        %v698 = vld [vmem:[%s5 + $0x68] sm:$0xf]
        %v699 = vld [vmem:[%s5 + $0x6c] sm:$0xf]
        %v700 = vld [vmem:[%s5 + $0x70] sm:$0xf]
        %v701 = vld [vmem:[%s5 + $0x74] sm:$0xf]
        %v702 = vld [vmem:[%s5 + $0x78] sm:$0xf]
        %v703 = vld [vmem:[%s5 + $0x7c] sm:$0xf]
        %v736 = vunpack.c.l.b16 %v672
        %v737 = vunpack.c.l.b16 %v673
        %v738 = vunpack.c.l.b16 %v674
        %v739 = vunpack.c.l.b16 %v675
        %v740 = vunpack.c.l.b16 %v676
        %v741 = vunpack.c.l.b16 %v677
        %v742 = vunpack.c.l.b16 %v678
        %v743 = vunpack.c.l.b16 %v679
        %v744 = vunpack.c.l.b16 %v680
        %v745 = vunpack.c.l.b16 %v681
        %v746 = vunpack.c.l.b16 %v682
        %v747 = vunpack.c.l.b16 %v683
        %v748 = vunpack.c.l.b16 %v684
        %v749 = vunpack.c.l.b16 %v685
        %v750 = vunpack.c.l.b16 %v686
        %v751 = vunpack.c.l.b16 %v687
        %v752 = vunpack.c.l.b16 %v688
        %v753 = vunpack.c.l.b16 %v689
        %v754 = vunpack.c.l.b16 %v690
        %v755 = vunpack.c.l.b16 %v691
        %v756 = vunpack.c.l.b16 %v692
        %v757 = vunpack.c.l.b16 %v693
        %v758 = vunpack.c.l.b16 %v694
        %v759 = vunpack.c.l.b16 %v695
        %v760 = vunpack.c.l.b16 %v696
        %v761 = vunpack.c.l.b16 %v697
        %v762 = vunpack.c.l.b16 %v698
        %v763 = vunpack.c.l.b16 %v699
        %v764 = vunpack.c.l.b16 %v700
        %v765 = vunpack.c.l.b16 %v701
        %v766 = vunpack.c.l.b16 %v702
        %v767 = vunpack.c.l.b16 %v703
        %v768 = vpack.c.b16 %v737, %v736
        %v769 = vpack.c.b16 %v739, %v738
        %v770 = vpack.c.b16 %v741, %v740
        %v771 = vpack.c.b16 %v743, %v742
        %v772 = vpack.c.b16 %v745, %v744
        %v773 = vpack.c.b16 %v747, %v746
        %v774 = vpack.c.b16 %v749, %v748
        %v775 = vpack.c.b16 %v751, %v750
        %v776 = vpack.c.b16 %v753, %v752
        %v777 = vpack.c.b16 %v755, %v754
        %v778 = vpack.c.b16 %v757, %v756
        %v779 = vpack.c.b16 %v759, %v758
        %v780 = vpack.c.b16 %v761, %v760
        %v781 = vpack.c.b16 %v763, %v762
        %v782 = vpack.c.b16 %v765, %v764
        %v783 = vpack.c.b16 %v767, %v766
        %800 = vmatprep.subr.bf16.mxu0 0
        %801 = vmatpush1.bf16.msra.mxu0 %v768
        %802 = vmatprep.subr.bf16.mxu0 0
        %803 = vmatpush1.bf16.msra.mxu0 %v769
        %804 = vmatprep.subr.bf16.mxu0 0
        %805 = vmatpush1.bf16.msra.mxu0 %v770
        %806 = vmatprep.subr.bf16.mxu0 0
        %807 = vmatpush1.bf16.msra.mxu0 %v771
        %808 = vmatprep.subr.bf16.mxu0 0
        %809 = vmatpush1.bf16.msra.mxu0 %v772
        %810 = vmatprep.subr.bf16.mxu0 0
        %811 = vmatpush1.bf16.msra.mxu0 %v773
        %812 = vmatprep.subr.bf16.mxu0 0
        %813 = vmatpush1.bf16.msra.mxu0 %v774
        %814 = vmatprep.subr.bf16.mxu0 0
        %815 = vmatpush1.bf16.msra.mxu0 %v775
        %816 = vmatprep.subr.bf16.mxu0 0
        %817 = vmatpush1.bf16.msra.mxu0 %v776
        %818 = vmatprep.subr.bf16.mxu0 0
        %819 = vmatpush1.bf16.msra.mxu0 %v777
        %820 = vmatprep.subr.bf16.mxu0 0
        %821 = vmatpush1.bf16.msra.mxu0 %v778
        %822 = vmatprep.subr.bf16.mxu0 0
        %823 = vmatpush1.bf16.msra.mxu0 %v779
        %824 = vmatprep.subr.bf16.mxu0 0
        %825 = vmatpush1.bf16.msra.mxu0 %v780
        %826 = vmatprep.subr.bf16.mxu0 0
        %827 = vmatpush1.bf16.msra.mxu0 %v781
        %828 = vmatprep.subr.bf16.mxu0 0
        %829 = vmatpush1.bf16.msra.mxu0 %v782
        %830 = vmatprep.subr.bf16.mxu0 0
        %831 = vmatpush1.bf16.msra.mxu0 %v783
        %832 = vmatprep.mubr.bf16.mxu0 %v432
        %833 = vmatmul.mubr.bf16.gmra.mrb[0].mxu0 %v431
        %v834 = vpop.f32.mrb[0].mxu0
        %v835 = vadd.f32 0.0, %v834
        %v836 = vpop.f32.mrb[0].mxu0
        %v837 = vpop.f32.mrb[0].mxu0
        %v838 = vpop.f32.mrb[0].mxu0
        %839 = vdwg.mxu0
        %v840 = vld [vmem:[%s6] sm:$0xff]
        %v842 = vsel %vm660, %v671, 0
        %844 = vmatprep.subr.mxu0 0.0
        %845 = vmatpush1.msra.mxu0 %v840
        %846 = vmatprep.subr.mxu0 0.0
        %847 = vmatpush1.msra.mxu0 0.0
        %848 = vmatprep.subr.mxu0 0.0
        %849 = vmatpush1.msra.mxu0 0.0
        %850 = vmatprep.subr.mxu0 0.0
        %851 = vmatpush1.msra.mxu0 0.0
        %852 = vmatprep.subr.mxu0 0.0
        %853 = vmatpush1.msra.mxu0 0.0
        %854 = vmatprep.subr.mxu0 0.0
        %855 = vmatpush1.msra.mxu0 0.0
        %856 = vmatprep.subr.mxu0 0.0
        %857 = vmatpush1.msra.mxu0 0.0
        %858 = vmatprep.subr.mxu0 0.0
        %859 = vmatpush1.msra.mxu0 0.0
        %860 = vmatprep.subr.mxu0 0.0
        %861 = vmatpush1.msra.mxu0 0.0
        %862 = vmatprep.subr.mxu0 0.0
        %863 = vmatpush1.msra.mxu0 0.0
        %864 = vmatprep.subr.mxu0 0.0
        %865 = vmatpush1.msra.mxu0 0.0
        %866 = vmatprep.subr.mxu0 0.0
        %867 = vmatpush1.msra.mxu0 0.0
        %868 = vmatprep.subr.mxu0 0.0
        %869 = vmatpush1.msra.mxu0 0.0
        %870 = vmatprep.subr.mxu0 0.0
        %871 = vmatpush1.msra.mxu0 0.0
        %872 = vmatprep.subr.mxu0 0.0
        %873 = vmatpush1.msra.mxu0 0.0
        %874 = vmatprep.subr.mxu0 0.0
        %875 = vmatpush1.msra.mxu0 0.0
        %876 = vmatprep.subr.mxu0 0.0
        %877 = vmatpush1.msra.mxu0 0.0
        %878 = vmatprep.subr.mxu0 0.0
        %879 = vmatpush1.msra.mxu0 0.0
        %880 = vmatprep.subr.mxu0 0.0
        %881 = vmatpush1.msra.mxu0 0.0
        %882 = vmatprep.subr.mxu0 0.0
        %883 = vmatpush1.msra.mxu0 0.0
        %884 = vmatprep.subr.mxu0 0.0
        %885 = vmatpush1.msra.mxu0 0.0
        %886 = vmatprep.subr.mxu0 0.0
        %887 = vmatpush1.msra.mxu0 0.0
        %888 = vmatprep.subr.mxu0 0.0
        %889 = vmatpush1.msra.mxu0 0.0
        %890 = vmatprep.subr.mxu0 0.0
        %891 = vmatpush1.msra.mxu0 0.0
        %892 = vmatprep.subr.mxu0 0.0
        %893 = vmatpush1.msra.mxu0 0.0
        %894 = vmatprep.subr.mxu0 0.0
        %895 = vmatpush1.msra.mxu0 0.0
        %896 = vmatprep.subr.mxu0 0.0
        %897 = vmatpush1.msra.mxu0 0.0
        %898 = vmatprep.subr.mxu0 0.0
        %899 = vmatpush1.msra.mxu0 0.0
        %900 = vmatprep.subr.mxu0 0.0
        %901 = vmatpush1.msra.mxu0 0.0
        %902 = vmatprep.subr.mxu0 0.0
        %903 = vmatpush1.msra.mxu0 0.0
        %904 = vmatprep.subr.mxu0 0.0
        %905 = vmatpush1.msra.mxu0 0.0
        %906 = vmatprep.subr.mxu0 0.0
        %907 = vmatpush1.msra.mxu0 0.0
        %908 = vmatprep.mubr.f32.mxu0 0.0
        %909 = vmatmul.mubr.f32.gmra.mrb[0].mxu0 %v842
        %v910 = vpop.f32.mrb[0].mxu0
        %v911 = vadd.f32 0.0, %v910
        %v912 = vpop.f32.mrb[0].mxu0
        %913 = vdwg.mxu0
        %v914 = vmul.f32 %v911, %v835
        %v915 = vld [vmem:[%s7] sm:$0xff]
        %v916 = vld [vmem:[%s7 + $0x8] sm:$0xff]
        %v917 = vld [vmem:[%s7 + $0x10] sm:$0xff]
        %v918 = vld [vmem:[%s7 + $0x18] sm:$0xff]
        %v919 = vld [vmem:[%s7 + $0x20] sm:$0xff]
        %v920 = vld [vmem:[%s7 + $0x28] sm:$0xff]
        %v921 = vld [vmem:[%s7 + $0x30] sm:$0xff]
        %v922 = vld [vmem:[%s7 + $0x38] sm:$0xff]
        %v923 = vld [vmem:[%s7 + $0x40] sm:$0xff]
        %v924 = vld [vmem:[%s7 + $0x48] sm:$0xff]
        %v925 = vld [vmem:[%s7 + $0x50] sm:$0xff]
        %v926 = vld [vmem:[%s7 + $0x58] sm:$0xff]
        %v927 = vld [vmem:[%s7 + $0x60] sm:$0xff]
        %v928 = vld [vmem:[%s7 + $0x68] sm:$0xff]
        %v929 = vld [vmem:[%s7 + $0x70] sm:$0xff]
        %v930 = vld [vmem:[%s7 + $0x78] sm:$0xff]
        %v931 = vld [vmem:[%s8] sm:$0x1]
        %v933 = vlaneseq
        %v934 = vshrl.u32 %v933, 7
        %v935 = vsub.s32 0, %v934
        %v936 = vrot.slane %v931, %v935
        %938 = vmatprep.subr.mxu0 0.0
        %939 = vmatpush1.msra.mxu0 %v915
        %940 = vmatprep.subr.mxu0 0.0
        %941 = vmatpush1.msra.mxu0 %v916
        %942 = vmatprep.subr.mxu0 0.0
        %943 = vmatpush1.msra.mxu0 %v917
        %944 = vmatprep.subr.mxu0 0.0
        %945 = vmatpush1.msra.mxu0 %v918
        %946 = vmatprep.subr.mxu0 0.0
        %947 = vmatpush1.msra.mxu0 %v919
        %948 = vmatprep.subr.mxu0 0.0
        %949 = vmatpush1.msra.mxu0 %v920
        %950 = vmatprep.subr.mxu0 0.0
        %951 = vmatpush1.msra.mxu0 %v921
        %952 = vmatprep.subr.mxu0 0.0
        %953 = vmatpush1.msra.mxu0 %v922
        %954 = vmatprep.subr.mxu0 0.0
        %955 = vmatpush1.msra.mxu0 %v923
        %956 = vmatprep.subr.mxu0 0.0
        %957 = vmatpush1.msra.mxu0 %v924
        %958 = vmatprep.subr.mxu0 0.0
        %959 = vmatpush1.msra.mxu0 %v925
        %960 = vmatprep.subr.mxu0 0.0
        %961 = vmatpush1.msra.mxu0 %v926
        %962 = vmatprep.subr.mxu0 0.0
        %963 = vmatpush1.msra.mxu0 %v927
        %964 = vmatprep.subr.mxu0 0.0
        %965 = vmatpush1.msra.mxu0 %v928
        %966 = vmatprep.subr.mxu0 0.0
        %967 = vmatpush1.msra.mxu0 %v929
        %968 = vmatprep.subr.mxu0 0.0
        %969 = vmatpush1.msra.mxu0 %v930
        %970 = vmatprep.subr.mxu0 0.0
        %971 = vmatpush1.msra.mxu0 0.0
        %972 = vmatprep.subr.mxu0 0.0
        %973 = vmatpush1.msra.mxu0 0.0
        %974 = vmatprep.subr.mxu0 0.0
        %975 = vmatpush1.msra.mxu0 0.0
        %976 = vmatprep.subr.mxu0 0.0
        %977 = vmatpush1.msra.mxu0 0.0
        %978 = vmatprep.subr.mxu0 0.0
        %979 = vmatpush1.msra.mxu0 0.0
        %980 = vmatprep.subr.mxu0 0.0
        %981 = vmatpush1.msra.mxu0 0.0
        %982 = vmatprep.subr.mxu0 0.0
        %983 = vmatpush1.msra.mxu0 0.0
        %984 = vmatprep.subr.mxu0 0.0
        %985 = vmatpush1.msra.mxu0 0.0
        %986 = vmatprep.subr.mxu0 0.0
        %987 = vmatpush1.msra.mxu0 0.0
        %988 = vmatprep.subr.mxu0 0.0
        %989 = vmatpush1.msra.mxu0 0.0
        %990 = vmatprep.subr.mxu0 0.0
        %991 = vmatpush1.msra.mxu0 0.0
        %992 = vmatprep.subr.mxu0 0.0
        %993 = vmatpush1.msra.mxu0 0.0
        %994 = vmatprep.subr.mxu0 0.0
        %995 = vmatpush1.msra.mxu0 0.0
        %996 = vmatprep.subr.mxu0 0.0
        %997 = vmatpush1.msra.mxu0 0.0
        %998 = vmatprep.subr.mxu0 0.0
        %999 = vmatpush1.msra.mxu0 0.0
        %1000 = vmatprep.subr.mxu0 0.0
        %1001 = vmatpush1.msra.mxu0 0.0
        %1002 = vmatprep.mubr.f32.mxu0 0.0
        %1003 = vmatmul.mubr.f32.gmra.mrb[0].mxu0 %v914
        %v1004 = vpop.f32.mrb[0].mxu0
        %v1005 = vadd.f32 %v936, %v1004
        %v1006 = vpop.f32.mrb[0].mxu0
        %1007 = vdwg.mxu0
        %1009 = vrot.lane.b32.xlu0 %v388, 8
        %v1010 = vpop.permute.xlu0 %1009
        %vm1012 = vcmask 130048
        %v1013 = vsel %vm1012, %v1005, %v1010
        %vm1014 = vcmask 261120
        %1015 = vst.msk [vmem:[%s385] sm:$0xff] %vm1014, %v1013
        %s1016 = sand.u32 %s236, 1
        %s1017 = scalar_lea.sflag [#allocation4], %s1016
        %s1018 = sand.u32 %s236, 1
        %s1019 = smul.addr %s1018, 8
        %s1020 = scalar_lea.vmem [#allocation7], %s1019
        // Predicated region
        $region65: #{tpu_custom_call.1} parent=55 // pred_check
          %p1021 = pneg %p246
        $region66: #{tpu_custom_call.1} parent=55 // pred_check_branch
          %1023 = sbr.rel (%p1021) target = $region68
        $region67: #{tpu_custom_call.1} parent=55 // pred_region
          %s1025 = ssub.s32 128, 128
          %1026 = vsyncadd %s1017, %s1025
          %s1027 = smul.addr %s29, 128
          %s1028 = scalar_lea.hbm %s9, %s1027
          %s1030 = sshll.u32 %s1020, 4
          %s1031 = int_to_ptr.vmem [resolvable:$true] %s1030
          %1033 = dma.vmem_to_hbm [thread:$0]  %s1031, 128, %s1028, %s1017
        $region68: #{tpu_custom_call.1} parent=55 // pred_fallthru
          _
      $region56: #{tpu_custom_call.1} parent=5 // pred_fallthru
        _
      %p1034 = scmp.le.s32.totalorder 2, %s24
      // Predicated region
      $region69: #{tpu_custom_call.1} parent=5 // pred_check
        %p1035 = pneg %p1034
      $region70: #{tpu_custom_call.1} parent=5 // pred_check_branch
        %1037 = sbr.rel (%p1035) target = $region72
      $region71: #{tpu_custom_call.1} parent=5 // pred_region
        %s1038 = ssub.s32 %s24, 2
        // Predicated region
        $region73: #{tpu_custom_call.1} parent=71 // pred_check
          %p1039 = pneg %p252
        $region74: #{tpu_custom_call.1} parent=71 // pred_check_branch
          %1041 = sbr.rel (%p1039) target = $region76
        $region75: #{tpu_custom_call.1} parent=71 // pred_region
          %s1042 = sand.u32 %s237, 1
          %s1043 = scalar_lea.sflag [#allocation4], %s1042
          %s1044 = sand.u32 %s237, 1
          %s1045 = smul.addr %s1044, 8
          %s1046 = scalar_lea.vmem [#allocation7], %s1045
          %1047 = dma.done %s1043, 128
        $region76: #{tpu_custom_call.1} parent=71 // pred_fallthru
          _
      $region72: #{tpu_custom_call.1} parent=5 // pred_fallthru
        _
    $region6: #{tpu_custom_call.1} parent=1 // loop_footer
      %s28 = sadd.s32 1, %s24
    $region7: #{tpu_custom_call.1} parent=1 // loop_footer_branch
      %23 = sbr.rel target = $region3
    $region8: #{tpu_custom_call.1} parent=1 // loop_exit
      _
    %1048 = vsyncpa [#allocation3], 1
    %s1049 = scalar_lea.sflag [#allocation3], 1
    %1050 = vsyncpa %s1049, 1
    %1051 = vsyncpa [#allocation6], 1
    %s1052 = scalar_lea.sflag [#allocation6], 1
    %1053 = vsyncpa %s1052, 1
    %1054 = vsyncpa [#allocation4], 1
    %s1055 = scalar_lea.sflag [#allocation4], 1
    %1056 = vsyncpa %s1055, 1

// kernel: tpu_custom_call.1
$region0: #{tpu_custom_call.1}
  #allocation0 [shape = 'u32[]', space=smem, size = 0x4, offset = 0x4, fixed_abs, tag = 'smem constant byte address 0x4 - core index']
  #allocation1 [shape = 'u32[144,128]{1,0:T(1,128)}', space=vmem, size = 0x12000, scoped, tag = 'internal scratch']
  %s0 = inlined_call_operand.hbm [shape: bf16[16,256], index: 0, kind: input, shape index: {}]
  %s1 = inlined_call_operand.hbm [shape: f32[16,24], index: 1, kind: input, shape index: {}]
  %s2 = inlined_call_operand.vmem [shape: bf16[256,128], index: 2, kind: input, shape index: {}]
  %s3 = inlined_call_operand.vmem [shape: f32[1,128], index: 3, kind: input, shape index: {}]
  %s4 = inlined_call_operand.vmem [shape: f32[128,8], index: 4, kind: input, shape index: {}]
  %s5 = inlined_call_operand.vmem [shape: bf16[256,128], index: 5, kind: input, shape index: {}]
  %s6 = inlined_call_operand.vmem [shape: f32[8,128], index: 6, kind: input, shape index: {}]
  %s7 = inlined_call_operand.vmem [shape: f32[128,16], index: 7, kind: input, shape index: {}]
  %s8 = inlined_call_operand.vmem [shape: f32[1,16], index: 8, kind: input, shape index: {}]
  %s9 = inlined_call_operand.hbm [shape: f32[16,32], index: 9, kind: output, shape index: {}]
  %s10 = sld [smem:[#allocation0]]
  $region77: #{tpu_custom_call.1} parent=0
    _
  %s12 = ssub.s32 1, %s10
  %s13 = scalar_select 0, %s12, %s10
  $region1: #{tpu_custom_call.1} parent=0
    #allocation2 [shape = 'u8[8192]{0}', space=vmem, size = 0x2000, scoped, tag = 'input window, operand 0']
    #allocation3 [shape = 's32[2]{0}', space=sflag, size = 0x8, scoped, tag = 'scoped memory for tpu_custom_call.1']
    #allocation4 [shape = 's32[2]{0}', space=sflag, size = 0x8, scoped, tag = 'scoped memory for tpu_custom_call.1']
    #allocation5 [shape = 'u8[8192]{0}', space=vmem, size = 0x2000, scoped, tag = 'input window, operand 1']
    #allocation6 [shape = 's32[2]{0}', space=sflag, size = 0x8, scoped, tag = 'scoped memory for tpu_custom_call.1']
    #allocation7 [shape = 'u8[8192]{0}', space=vmem, size = 0x2000, scoped, tag = 'output window, operand 0']
    %14 = vsyncpa [#allocation3], 0
    %s15 = scalar_lea.sflag [#allocation3], 1
    %16 = vsyncpa %s15, 0
    %17 = vsyncpa [#allocation6], 0
    %s18 = scalar_lea.sflag [#allocation6], 1
    %19 = vsyncpa %s18, 0
    %20 = vsyncpa [#allocation4], 0
    %s21 = scalar_lea.sflag [#allocation4], 1
    %22 = vsyncpa %s21, 0
    loop: start=0, step=1, limit=4
    $region2: #{tpu_custom_call.1} parent=1 // loop_pre_header
      _
    $region3: #{tpu_custom_call.1} parent=1 // loop_header
      %s24 = sphi 0, %s28
      %p25 = scmp.ge.s32.totalorder %s24, 4
      %s34 = sphi 0, %s36
      %s37 = sphi 0, %s34
      %s38 = sphi 0, %s37
      %s54 = sphi 0, %s38
      %s60 = sphi 0, %s62
      %s63 = sphi 0, %s60
      %s64 = sphi 0, %s63
      %s80 = sphi 0, %s64
      %s84 = sphi 0, %s84
      %s86 = sphi 0, %s84
      %s87 = sphi 0, %s86
      %s101 = sphi 0, %s87
      %s105 = sphi 0, %s105
      %s107 = sphi 0, %s105
      %s108 = sphi 0, %s107
      %s122 = sphi 0, %s108
      %s126 = sphi 0, %s126
      %s128 = sphi 0, %s126
      %s129 = sphi 0, %s128
      %s143 = sphi 0, %s129
      %s147 = sphi 0, %s147
      %s149 = sphi 0, %s147
      %s150 = sphi 0, %s149
      %s164 = sphi 0, %s150
      %s168 = sphi 0, %s168
      %s170 = sphi 0, %s168
      %s171 = sphi 0, %s170
      %s185 = sphi 0, %s171
      %s189 = sphi 0, %s189
      %s191 = sphi 0, %s189
      %s192 = sphi 0, %s191
      %s206 = sphi 0, %s192
      %s210 = sphi 0, %s210
      %s212 = sphi 0, %s210
      %s213 = sphi 0, %s212
      %s227 = sphi 0, %s213
      %s233 = sphi 0, %s235
      %s236 = sphi 0, %s233
      %s237 = sphi 0, %s236
      %s253 = sphi 0, %s237
    $region4: #{tpu_custom_call.1} parent=1 // loop_header_branch
      %27 = sbr.rel (%p25) target = $region8
    $region5: #{tpu_custom_call.1} parent=1 // loop_body
      %s29 = ssub.s32 %s24, 1
      %s30 = ssub.s32 %s24, 2
      %s31 = sadd.s32 %s24, 1
      %s32 = ssub.s32 %s24, %s31
      %p33 = scmp.eq.s32.totalorder %s32, 0
      %s35 = sadd.s32 %s34, 1
      %s36 = scalar_select %p33, %s34, %s35
      %p39 = pneg %p33
      %p40 = scmp.eq.s32.totalorder %s24, 1
      %p41 = por %p39, %p40
      %p42 = scmp.ne.s32.totalorder %s34, %s37
      %p43 = scmp.eq.s32.totalorder %s24, 0
      %p44 = por %p42, %p43
      %p45 = scmp.ne.s32.totalorder %s34, %s37
      %p46 = scmp.eq.s32.totalorder %s29, 1
      %p47 = por %p45, %p46
      %p48 = scmp.ne.s32.totalorder %s37, %s38
      %p49 = scmp.eq.s32.totalorder %s29, 0
      %p50 = por %p48, %p49
      %p51 = scmp.ne.s32.totalorder %s37, %s38
      %p52 = scmp.eq.s32.totalorder %s30, 1
      %p53 = por %p51, %p52
      %p55 = scmp.ne.s32.totalorder %s38, %s54
      %p56 = scmp.eq.s32.totalorder %s30, 0
      %p57 = por %p55, %p56
      %s58 = ssub.s32 %s24, %s31
      %p59 = scmp.eq.s32.totalorder %s58, 0
      %s61 = sadd.s32 %s60, 1
      %s62 = scalar_select %p59, %s60, %s61
      %p65 = pneg %p59
      %p66 = scmp.eq.s32.totalorder %s24, 1
      %p67 = por %p65, %p66
      %p68 = scmp.ne.s32.totalorder %s60, %s63
      %p69 = scmp.eq.s32.totalorder %s24, 0
      %p70 = por %p68, %p69
      %p71 = scmp.ne.s32.totalorder %s60, %s63
      %p72 = scmp.eq.s32.totalorder %s29, 1
      %p73 = por %p71, %p72
      %p74 = scmp.ne.s32.totalorder %s63, %s64
      %p75 = scmp.eq.s32.totalorder %s29, 0
      %p76 = por %p74, %p75
      %p77 = scmp.ne.s32.totalorder %s63, %s64
      %p78 = scmp.eq.s32.totalorder %s30, 1
      %p79 = por %p77, %p78
      %p81 = scmp.ne.s32.totalorder %s64, %s80
      %p82 = scmp.eq.s32.totalorder %s30, 0
      %p83 = por %p81, %p82
      %s85 = sadd.s32 %s84, 1
      %p88 = scmp.eq.s32.totalorder %s24, 1
      %p89 = scmp.ne.s32.totalorder %s84, %s86
      %p90 = scmp.eq.s32.totalorder %s24, 0
      %p91 = por %p89, %p90
      %p92 = scmp.ne.s32.totalorder %s84, %s86
      %p93 = scmp.eq.s32.totalorder %s29, 1
      %p94 = por %p92, %p93
      %p95 = scmp.ne.s32.totalorder %s86, %s87
      %p96 = scmp.eq.s32.totalorder %s29, 0
      %p97 = por %p95, %p96
      %p98 = scmp.ne.s32.totalorder %s86, %s87
      %p99 = scmp.eq.s32.totalorder %s30, 1
      %p100 = por %p98, %p99
      %p102 = scmp.ne.s32.totalorder %s87, %s101
      %p103 = scmp.eq.s32.totalorder %s30, 0
      %p104 = por %p102, %p103
      %s106 = sadd.s32 %s105, 1
      %p109 = scmp.eq.s32.totalorder %s24, 1
      %p110 = scmp.ne.s32.totalorder %s105, %s107
      %p111 = scmp.eq.s32.totalorder %s24, 0
      %p112 = por %p110, %p111
      %p113 = scmp.ne.s32.totalorder %s105, %s107
      %p114 = scmp.eq.s32.totalorder %s29, 1
      %p115 = por %p113, %p114
      %p116 = scmp.ne.s32.totalorder %s107, %s108
      %p117 = scmp.eq.s32.totalorder %s29, 0
      %p118 = por %p116, %p117
      %p119 = scmp.ne.s32.totalorder %s107, %s108
      %p120 = scmp.eq.s32.totalorder %s30, 1
      %p121 = por %p119, %p120
      %p123 = scmp.ne.s32.totalorder %s108, %s122
      %p124 = scmp.eq.s32.totalorder %s30, 0
      %p125 = por %p123, %p124
      %s127 = sadd.s32 %s126, 1
      %p130 = scmp.eq.s32.totalorder %s24, 1
      %p131 = scmp.ne.s32.totalorder %s126, %s128
      %p132 = scmp.eq.s32.totalorder %s24, 0
      %p133 = por %p131, %p132
      %p134 = scmp.ne.s32.totalorder %s126, %s128
      %p135 = scmp.eq.s32.totalorder %s29, 1
      %p136 = por %p134, %p135
      %p137 = scmp.ne.s32.totalorder %s128, %s129
      %p138 = scmp.eq.s32.totalorder %s29, 0
      %p139 = por %p137, %p138
      %p140 = scmp.ne.s32.totalorder %s128, %s129
      %p141 = scmp.eq.s32.totalorder %s30, 1
      %p142 = por %p140, %p141
      %p144 = scmp.ne.s32.totalorder %s129, %s143
      %p145 = scmp.eq.s32.totalorder %s30, 0
      %p146 = por %p144, %p145
      %s148 = sadd.s32 %s147, 1
      %p151 = scmp.eq.s32.totalorder %s24, 1
      %p152 = scmp.ne.s32.totalorder %s147, %s149
      %p153 = scmp.eq.s32.totalorder %s24, 0
      %p154 = por %p152, %p153
      %p155 = scmp.ne.s32.totalorder %s147, %s149
      %p156 = scmp.eq.s32.totalorder %s29, 1
      %p157 = por %p155, %p156
      %p158 = scmp.ne.s32.totalorder %s149, %s150
      %p159 = scmp.eq.s32.totalorder %s29, 0
      %p160 = por %p158, %p159
      %p161 = scmp.ne.s32.totalorder %s149, %s150
      %p162 = scmp.eq.s32.totalorder %s30, 1
      %p163 = por %p161, %p162
      %p165 = scmp.ne.s32.totalorder %s150, %s164
      %p166 = scmp.eq.s32.totalorder %s30, 0
      %p167 = por %p165, %p166
      %s169 = sadd.s32 %s168, 1
      %p172 = scmp.eq.s32.totalorder %s24, 1
      %p173 = scmp.ne.s32.totalorder %s168, %s170
      %p174 = scmp.eq.s32.totalorder %s24, 0
      %p175 = por %p173, %p174
      %p176 = scmp.ne.s32.totalorder %s168, %s170
      %p177 = scmp.eq.s32.totalorder %s29, 1
      %p178 = por %p176, %p177
      %p179 = scmp.ne.s32.totalorder %s170, %s171
      %p180 = scmp.eq.s32.totalorder %s29, 0
      %p181 = por %p179, %p180
      %p182 = scmp.ne.s32.totalorder %s170, %s171
      %p183 = scmp.eq.s32.totalorder %s30, 1
      %p184 = por %p182, %p183
      %p186 = scmp.ne.s32.totalorder %s171, %s185
      %p187 = scmp.eq.s32.totalorder %s30, 0
      %p188 = por %p186, %p187
      %s190 = sadd.s32 %s189, 1
      %p193 = scmp.eq.s32.totalorder %s24, 1
      %p194 = scmp.ne.s32.totalorder %s189, %s191
      %p195 = scmp.eq.s32.totalorder %s24, 0
      %p196 = por %p194, %p195
      %p197 = scmp.ne.s32.totalorder %s189, %s191
      %p198 = scmp.eq.s32.totalorder %s29, 1
      %p199 = por %p197, %p198
      %p200 = scmp.ne.s32.totalorder %s191, %s192
      %p201 = scmp.eq.s32.totalorder %s29, 0
      %p202 = por %p200, %p201
      %p203 = scmp.ne.s32.totalorder %s191, %s192
      %p204 = scmp.eq.s32.totalorder %s30, 1
      %p205 = por %p203, %p204
      %p207 = scmp.ne.s32.totalorder %s192, %s206
      %p208 = scmp.eq.s32.totalorder %s30, 0
      %p209 = por %p207, %p208
      %s211 = sadd.s32 %s210, 1
      %p214 = scmp.eq.s32.totalorder %s24, 1
      %p215 = scmp.ne.s32.totalorder %s210, %s212
      %p216 = scmp.eq.s32.totalorder %s24, 0
      %p217 = por %p215, %p216
      %p218 = scmp.ne.s32.totalorder %s210, %s212
      %p219 = scmp.eq.s32.totalorder %s29, 1
      %p220 = por %p218, %p219
      %p221 = scmp.ne.s32.totalorder %s212, %s213
      %p222 = scmp.eq.s32.totalorder %s29, 0
      %p223 = por %p221, %p222
      %p224 = scmp.ne.s32.totalorder %s212, %s213
      %p225 = scmp.eq.s32.totalorder %s30, 1
      %p226 = por %p224, %p225
      %p228 = scmp.ne.s32.totalorder %s213, %s227
      %p229 = scmp.eq.s32.totalorder %s30, 0
      %p230 = por %p228, %p229
      %s231 = ssub.s32 %s24, %s31
      %p232 = scmp.eq.s32.totalorder %s231, 0
      %s234 = sadd.s32 %s233, 1
      %s235 = scalar_select %p232, %s233, %s234
      %p238 = pneg %p232
      %p239 = scmp.eq.s32.totalorder %s24, 1
      %p240 = por %p238, %p239
      %p241 = scmp.ne.s32.totalorder %s233, %s236
      %p242 = scmp.eq.s32.totalorder %s24, 0
      %p243 = por %p241, %p242
      %p244 = scmp.ne.s32.totalorder %s233, %s236
      %p245 = scmp.eq.s32.totalorder %s29, 1
      %p246 = por %p244, %p245
      %p247 = scmp.ne.s32.totalorder %s236, %s237
      %p248 = scmp.eq.s32.totalorder %s29, 0
      %p249 = por %p247, %p248
      %p250 = scmp.ne.s32.totalorder %s236, %s237
      %p251 = scmp.eq.s32.totalorder %s30, 1
      %p252 = por %p250, %p251
      %p254 = scmp.ne.s32.totalorder %s237, %s253
      %p255 = scmp.eq.s32.totalorder %s30, 0
      %p256 = por %p254, %p255
      %p257 = scmp.le.s32.totalorder 1, %s24
      %p258 = scmp.lt.s32.totalorder %s24, 3
      %p259 = pnand %p257, %p258
      %p260 = pneg %p259
      // Predicated region
      $region9: #{tpu_custom_call.1} parent=5 // pred_check
        _
      $region10: #{tpu_custom_call.1} parent=5 // pred_check_branch
        %262 = sbr.rel (%p259) target = $region12
      $region11: #{tpu_custom_call.1} parent=5 // pred_region
        %s263 = ssub.s32 %s24, 1
        // Predicated region
        $region13: #{tpu_custom_call.1} parent=11 // pred_check
          %p264 = pneg %p97
        $region14: #{tpu_custom_call.1} parent=11 // pred_check_branch
          %266 = sbr.rel (%p264) target = $region16
        $region15: #{tpu_custom_call.1} parent=11 // pred_region
          _
        $region16: #{tpu_custom_call.1} parent=11 // pred_fallthru
          _
        // Predicated region
        $region17: #{tpu_custom_call.1} parent=11 // pred_check
          %p267 = pneg %p118
        $region18: #{tpu_custom_call.1} parent=11 // pred_check_branch
          %269 = sbr.rel (%p267) target = $region20
        $region19: #{tpu_custom_call.1} parent=11 // pred_region
          _
        $region20: #{tpu_custom_call.1} parent=11 // pred_fallthru
          _
        // Predicated region
        $region21: #{tpu_custom_call.1} parent=11 // pred_check
          %p270 = pneg %p139
        $region22: #{tpu_custom_call.1} parent=11 // pred_check_branch
          %272 = sbr.rel (%p270) target = $region24
        $region23: #{tpu_custom_call.1} parent=11 // pred_region
          _
        $region24: #{tpu_custom_call.1} parent=11 // pred_fallthru
          _
        // Predicated region
        $region25: #{tpu_custom_call.1} parent=11 // pred_check
          %p273 = pneg %p160
        $region26: #{tpu_custom_call.1} parent=11 // pred_check_branch
          %275 = sbr.rel (%p273) target = $region28
        $region27: #{tpu_custom_call.1} parent=11 // pred_region
          _
        $region28: #{tpu_custom_call.1} parent=11 // pred_fallthru
          _
        // Predicated region
        $region29: #{tpu_custom_call.1} parent=11 // pred_check
          %p276 = pneg %p181
        $region30: #{tpu_custom_call.1} parent=11 // pred_check_branch
          %278 = sbr.rel (%p276) target = $region32
        $region31: #{tpu_custom_call.1} parent=11 // pred_region
          _
        $region32: #{tpu_custom_call.1} parent=11 // pred_fallthru
          _
        // Predicated region
        $region33: #{tpu_custom_call.1} parent=11 // pred_check
          %p279 = pneg %p202
        $region34: #{tpu_custom_call.1} parent=11 // pred_check_branch
          %281 = sbr.rel (%p279) target = $region36
        $region35: #{tpu_custom_call.1} parent=11 // pred_region
          _
        $region36: #{tpu_custom_call.1} parent=11 // pred_fallthru
          _
        // Predicated region
        $region37: #{tpu_custom_call.1} parent=11 // pred_check
          %p282 = pneg %p223
        $region38: #{tpu_custom_call.1} parent=11 // pred_check_branch
          %284 = sbr.rel (%p282) target = $region40
        $region39: #{tpu_custom_call.1} parent=11 // pred_region
          _
        $region40: #{tpu_custom_call.1} parent=11 // pred_fallthru
          _
      $region12: #{tpu_custom_call.1} parent=5 // pred_fallthru
        _
      %p285 = scmp.lt.s32.totalorder %s24, 2
      // Predicated region
      $region41: #{tpu_custom_call.1} parent=5 // pred_check
        %p286 = pneg %p285
      $region42: #{tpu_custom_call.1} parent=5 // pred_check_branch
        %288 = sbr.rel (%p286) target = $region44
      $region43: #{tpu_custom_call.1} parent=5 // pred_region
        // Predicated region
        $region45: #{tpu_custom_call.1} parent=43 // pred_check
          %p289 = pneg %p44
        $region46: #{tpu_custom_call.1} parent=43 // pred_check_branch
          %291 = sbr.rel (%p289) target = $region48
        $region47: #{tpu_custom_call.1} parent=43 // pred_region
          %s292 = sand.u32 %s34, 1
          %s293 = scalar_lea.sflag [#allocation3], %s292
          %s294 = sand.u32 %s34, 1
          %s295 = smul.addr %s294, 8
          %s296 = scalar_lea.vmem [#allocation2], %s295
          %s298 = ssub.s32 128, 128
          %299 = vsyncadd %s293, %s298
          %s300 = smul.addr %s24, 2
          %s301 = smul.addr %s300, 64
          %s302 = scalar_lea.hbm %s0, %s301
          %s304 = sshll.u32 %s296, 4
          %s305 = int_to_ptr.vmem [resolvable:$true] %s304
          %307 = dma.hbm_to_vmem [thread:$0]  %s302, 128, %s305, %s293
        $region48: #{tpu_custom_call.1} parent=43 // pred_fallthru
          _
        // Predicated region
        $region49: #{tpu_custom_call.1} parent=43 // pred_check
          %p308 = pneg %p70
        $region50: #{tpu_custom_call.1} parent=43 // pred_check_branch
          %310 = sbr.rel (%p308) target = $region52
        $region51: #{tpu_custom_call.1} parent=43 // pred_region
          %s311 = sand.u32 %s60, 1
          %s312 = scalar_lea.sflag [#allocation6], %s311
          %s313 = sand.u32 %s60, 1
          %s314 = smul.addr %s313, 8
          %s315 = scalar_lea.vmem [#allocation5], %s314
          %s317 = ssub.s32 128, 128
          %318 = vsyncadd %s312, %s317
          %s319 = smul.addr %s24, 128
          %s320 = scalar_lea.hbm %s1, %s319
          %s322 = sshll.u32 %s315, 4
          %s323 = int_to_ptr.vmem [resolvable:$true] %s322
          %325 = dma.hbm_to_vmem [thread:$0]  %s320, 128, %s323, %s312
        $region52: #{tpu_custom_call.1} parent=43 // pred_fallthru
          _
      $region44: #{tpu_custom_call.1} parent=5 // pred_fallthru
        _
      %p326 = scmp.le.s32.totalorder 1, %s24
      %p327 = scmp.lt.s32.totalorder %s24, 3
      %p328 = pnand %p326, %p327
      %p329 = pneg %p328
      // Predicated region
      $region53: #{tpu_custom_call.1} parent=5 // pred_check
        _
      $region54: #{tpu_custom_call.1} parent=5 // pred_check_branch
        %331 = sbr.rel (%p328) target = $region56
      $region55: #{tpu_custom_call.1} parent=5 // pred_region
        %s332 = ssub.s32 %s24, 1
        %s333 = sand.u32 %s37, 1
        %s334 = scalar_lea.sflag [#allocation3], %s333
        %s335 = sand.u32 %s37, 1
        %s336 = smul.addr %s335, 8
        %s337 = scalar_lea.vmem [#allocation2], %s336
        // Predicated region
        $region57: #{tpu_custom_call.1} parent=55 // pred_check
          %p338 = pneg %p50
        $region58: #{tpu_custom_call.1} parent=55 // pred_check_branch
          %340 = sbr.rel (%p338) target = $region60
        $region59: #{tpu_custom_call.1} parent=55 // pred_region
          %341 = dma.done %s334, 128
        $region60: #{tpu_custom_call.1} parent=55 // pred_fallthru
          _
        %s342 = sand.u32 %s63, 1
        %s343 = scalar_lea.sflag [#allocation6], %s342
        %s344 = sand.u32 %s63, 1
        %s345 = smul.addr %s344, 8
        %s346 = scalar_lea.vmem [#allocation5], %s345
        // Predicated region
        $region61: #{tpu_custom_call.1} parent=55 // pred_check
          %p347 = pneg %p76
        $region62: #{tpu_custom_call.1} parent=55 // pred_check_branch
          %349 = sbr.rel (%p347) target = $region64
        $region63: #{tpu_custom_call.1} parent=55 // pred_region
          %350 = dma.done %s343, 128
        $region64: #{tpu_custom_call.1} parent=55 // pred_fallthru
          _
        %s351 = sand.u32 %s37, 1
        %s352 = scalar_lea.sflag [#allocation3], %s351
        %s353 = sand.u32 %s37, 1
        %s354 = smul.addr %s353, 8
        %s355 = scalar_lea.vmem [#allocation2], %s354
        %p356 = pneg %p50
        %p357 = pneg %p47
        %s358 = sand.u32 %s63, 1
        %s359 = scalar_lea.sflag [#allocation6], %s358
        %s360 = sand.u32 %s63, 1
        %s361 = smul.addr %s360, 8
        %s362 = scalar_lea.vmem [#allocation5], %s361
        %p363 = pneg %p76
        %p364 = pneg %p73
        %p365 = pneg %p97
        %p366 = pneg %p94
        %p367 = pneg %p118
        %p368 = pneg %p115
        %p369 = pneg %p139
        %p370 = pneg %p136
        %p371 = pneg %p160
        %p372 = pneg %p157
        %p373 = pneg %p181
        %p374 = pneg %p178
        %p375 = pneg %p202
        %p376 = pneg %p199
        %p377 = pneg %p223
        %p378 = pneg %p220
        %p379 = pneg %p249
        %p380 = pneg %p246
        %s381 = sand.u32 %s236, 1
        %s382 = scalar_lea.sflag [#allocation4], %s381
        %s383 = sand.u32 %s236, 1
        %s384 = smul.addr %s383, 8
        %s385 = scalar_lea.vmem [#allocation7], %s384
        %v387 = vld [vmem:[%s337] sm:$0xff]
        %v388 = vld [vmem:[%s346] sm:$0xff]
        %v389 = vld [vmem:[%s2] sm:$0xf]
        %v390 = vld [vmem:[%s2 + $0x4] sm:$0xf]
        %v391 = vld [vmem:[%s2 + $0x8] sm:$0xf]
        %v392 = vld [vmem:[%s2 + $0xc] sm:$0xf]
        %v393 = vld [vmem:[%s2 + $0x10] sm:$0xf]
        %v394 = vld [vmem:[%s2 + $0x14] sm:$0xf]
        %v395 = vld [vmem:[%s2 + $0x18] sm:$0xf]
        %v396 = vld [vmem:[%s2 + $0x1c] sm:$0xf]
        %v397 = vld [vmem:[%s2 + $0x20] sm:$0xf]
        %v398 = vld [vmem:[%s2 + $0x24] sm:$0xf]
        %v399 = vld [vmem:[%s2 + $0x28] sm:$0xf]
        %v400 = vld [vmem:[%s2 + $0x2c] sm:$0xf]
        %v401 = vld [vmem:[%s2 + $0x30] sm:$0xf]
        %v402 = vld [vmem:[%s2 + $0x34] sm:$0xf]
        %v403 = vld [vmem:[%s2 + $0x38] sm:$0xf]
        %v404 = vld [vmem:[%s2 + $0x3c] sm:$0xf]
        %v405 = vld [vmem:[%s2 + $0x40] sm:$0xf]
        %v406 = vld [vmem:[%s2 + $0x44] sm:$0xf]
        %v407 = vld [vmem:[%s2 + $0x48] sm:$0xf]
        %v408 = vld [vmem:[%s2 + $0x4c] sm:$0xf]
        %v409 = vld [vmem:[%s2 + $0x50] sm:$0xf]
        %v410 = vld [vmem:[%s2 + $0x54] sm:$0xf]
        %v411 = vld [vmem:[%s2 + $0x58] sm:$0xf]
        %v412 = vld [vmem:[%s2 + $0x5c] sm:$0xf]
        %v413 = vld [vmem:[%s2 + $0x60] sm:$0xf]
        %v414 = vld [vmem:[%s2 + $0x64] sm:$0xf]
        %v415 = vld [vmem:[%s2 + $0x68] sm:$0xf]
        %v416 = vld [vmem:[%s2 + $0x6c] sm:$0xf]
        %v417 = vld [vmem:[%s2 + $0x70] sm:$0xf]
        %v418 = vld [vmem:[%s2 + $0x74] sm:$0xf]
        %v419 = vld [vmem:[%s2 + $0x78] sm:$0xf]
        %v420 = vld [vmem:[%s2 + $0x7c] sm:$0xf]
        %v421 = vld [vmem:[%s3] sm:$0x1]
        %v423 = vlaneseq
        %v424 = vshrl.u32 %v423, 7
        %v425 = vsub.s32 0, %v424
        %v426 = vrot.slane %v421, %v425
        %v429 = vunpack.c.l.b16 %v387
        %v430 = vunpack.c.h.b16 %v387
        %v431 = vpack.c.b16 %v429, %v429
        %v432 = vpack.c.b16 %v430, %v430
        %v467 = vunpack.c.l.b16 %v389
        %v468 = vunpack.c.l.b16 %v390
        %v469 = vunpack.c.l.b16 %v391
        %v470 = vunpack.c.l.b16 %v392
        %v471 = vunpack.c.l.b16 %v393
        %v472 = vunpack.c.l.b16 %v394
        %v473 = vunpack.c.l.b16 %v395
        %v474 = vunpack.c.l.b16 %v396
        %v475 = vunpack.c.l.b16 %v397
        %v476 = vunpack.c.l.b16 %v398
        %v477 = vunpack.c.l.b16 %v399
        %v478 = vunpack.c.l.b16 %v400
        %v479 = vunpack.c.l.b16 %v401
        %v480 = vunpack.c.l.b16 %v402
        %v481 = vunpack.c.l.b16 %v403
        %v482 = vunpack.c.l.b16 %v404
        %v483 = vunpack.c.l.b16 %v405
        %v484 = vunpack.c.l.b16 %v406
        %v485 = vunpack.c.l.b16 %v407
        %v486 = vunpack.c.l.b16 %v408
        %v487 = vunpack.c.l.b16 %v409
        %v488 = vunpack.c.l.b16 %v410
        %v489 = vunpack.c.l.b16 %v411
        %v490 = vunpack.c.l.b16 %v412
        %v491 = vunpack.c.l.b16 %v413
        %v492 = vunpack.c.l.b16 %v414
        %v493 = vunpack.c.l.b16 %v415
        %v494 = vunpack.c.l.b16 %v416
        %v495 = vunpack.c.l.b16 %v417
        %v496 = vunpack.c.l.b16 %v418
        %v497 = vunpack.c.l.b16 %v419
        %v498 = vunpack.c.l.b16 %v420
        %v499 = vpack.c.b16 %v468, %v467
        %v500 = vpack.c.b16 %v470, %v469
        %v501 = vpack.c.b16 %v472, %v471
        %v502 = vpack.c.b16 %v474, %v473
        %v503 = vpack.c.b16 %v476, %v475
        %v504 = vpack.c.b16 %v478, %v477
        %v505 = vpack.c.b16 %v480, %v479
        %v506 = vpack.c.b16 %v482, %v481
        %v507 = vpack.c.b16 %v484, %v483
        %v508 = vpack.c.b16 %v486, %v485
        %v509 = vpack.c.b16 %v488, %v487
        %v510 = vpack.c.b16 %v490, %v489
        %v511 = vpack.c.b16 %v492, %v491
        %v512 = vpack.c.b16 %v494, %v493
        %v513 = vpack.c.b16 %v496, %v495
        %v514 = vpack.c.b16 %v498, %v497
        %531 = vmatprep.subr.bf16.mxu0 0
        %532 = vmatpush1.bf16.msra.mxu0 %v499
        %533 = vmatprep.subr.bf16.mxu0 0
        %534 = vmatpush1.bf16.msra.mxu0 %v500
        %535 = vmatprep.subr.bf16.mxu0 0
        %536 = vmatpush1.bf16.msra.mxu0 %v501
        %537 = vmatprep.subr.bf16.mxu0 0
        %538 = vmatpush1.bf16.msra.mxu0 %v502
        %539 = vmatprep.subr.bf16.mxu0 0
        %540 = vmatpush1.bf16.msra.mxu0 %v503
        %541 = vmatprep.subr.bf16.mxu0 0
        %542 = vmatpush1.bf16.msra.mxu0 %v504
        %543 = vmatprep.subr.bf16.mxu0 0
        %544 = vmatpush1.bf16.msra.mxu0 %v505
        %545 = vmatprep.subr.bf16.mxu0 0
        %546 = vmatpush1.bf16.msra.mxu0 %v506
        %547 = vmatprep.subr.bf16.mxu0 0
        %548 = vmatpush1.bf16.msra.mxu0 %v507
        %549 = vmatprep.subr.bf16.mxu0 0
        %550 = vmatpush1.bf16.msra.mxu0 %v508
        %551 = vmatprep.subr.bf16.mxu0 0
        %552 = vmatpush1.bf16.msra.mxu0 %v509
        %553 = vmatprep.subr.bf16.mxu0 0
        %554 = vmatpush1.bf16.msra.mxu0 %v510
        %555 = vmatprep.subr.bf16.mxu0 0
        %556 = vmatpush1.bf16.msra.mxu0 %v511
        %557 = vmatprep.subr.bf16.mxu0 0
        %558 = vmatpush1.bf16.msra.mxu0 %v512
        %559 = vmatprep.subr.bf16.mxu0 0
        %560 = vmatpush1.bf16.msra.mxu0 %v513
        %561 = vmatprep.subr.bf16.mxu0 0
        %562 = vmatpush1.bf16.msra.mxu0 %v514
        %563 = vmatprep.mubr.bf16.mxu0 %v432
        %564 = vmatmul.mubr.bf16.gmra.mrb[0].mxu0 %v431
        %v565 = vpop.f32.mrb[0].mxu0
        %v566 = vadd.f32 %v426, %v565
        %v567 = vpop.f32.mrb[0].mxu0
        %v568 = vpop.f32.mrb[0].mxu0
        %v569 = vpop.f32.mrb[0].mxu0
        %570 = vdwg.mxu0
        %v571 = vtanh.pop %v566
        %v572 = vld [vmem:[%s4] sm:$0xff]
        %v573 = vld [vmem:[%s4 + $0x8] sm:$0xff]
        %v574 = vld [vmem:[%s4 + $0x10] sm:$0xff]
        %v575 = vld [vmem:[%s4 + $0x18] sm:$0xff]
        %v576 = vld [vmem:[%s4 + $0x20] sm:$0xff]
        %v577 = vld [vmem:[%s4 + $0x28] sm:$0xff]
        %v578 = vld [vmem:[%s4 + $0x30] sm:$0xff]
        %v579 = vld [vmem:[%s4 + $0x38] sm:$0xff]
        %v580 = vld [vmem:[%s4 + $0x40] sm:$0xff]
        %v581 = vld [vmem:[%s4 + $0x48] sm:$0xff]
        %v582 = vld [vmem:[%s4 + $0x50] sm:$0xff]
        %v583 = vld [vmem:[%s4 + $0x58] sm:$0xff]
        %v584 = vld [vmem:[%s4 + $0x60] sm:$0xff]
        %v585 = vld [vmem:[%s4 + $0x68] sm:$0xff]
        %v586 = vld [vmem:[%s4 + $0x70] sm:$0xff]
        %v587 = vld [vmem:[%s4 + $0x78] sm:$0xff]
        %588 = vmatprep.subr.mxu0 0.0
        %589 = vmatpush1.msra.mxu0 %v572
        %590 = vmatprep.subr.mxu0 0.0
        %591 = vmatpush1.msra.mxu0 %v573
        %592 = vmatprep.subr.mxu0 0.0
        %593 = vmatpush1.msra.mxu0 %v574
        %594 = vmatprep.subr.mxu0 0.0
        %595 = vmatpush1.msra.mxu0 %v575
        %596 = vmatprep.subr.mxu0 0.0
        %597 = vmatpush1.msra.mxu0 %v576
        %598 = vmatprep.subr.mxu0 0.0
        %599 = vmatpush1.msra.mxu0 %v577
        %600 = vmatprep.subr.mxu0 0.0
        %601 = vmatpush1.msra.mxu0 %v578
        %602 = vmatprep.subr.mxu0 0.0
        %603 = vmatpush1.msra.mxu0 %v579
        %604 = vmatprep.subr.mxu0 0.0
        %605 = vmatpush1.msra.mxu0 %v580
        %606 = vmatprep.subr.mxu0 0.0
        %607 = vmatpush1.msra.mxu0 %v581
        %608 = vmatprep.subr.mxu0 0.0
        %609 = vmatpush1.msra.mxu0 %v582
        %610 = vmatprep.subr.mxu0 0.0
        %611 = vmatpush1.msra.mxu0 %v583
        %612 = vmatprep.subr.mxu0 0.0
        %613 = vmatpush1.msra.mxu0 %v584
        %614 = vmatprep.subr.mxu0 0.0
        %615 = vmatpush1.msra.mxu0 %v585
        %616 = vmatprep.subr.mxu0 0.0
        %617 = vmatpush1.msra.mxu0 %v586
        %618 = vmatprep.subr.mxu0 0.0
        %619 = vmatpush1.msra.mxu0 %v587
        %620 = vmatprep.subr.mxu0 0.0
        %621 = vmatpush1.msra.mxu0 0.0
        %622 = vmatprep.subr.mxu0 0.0
        %623 = vmatpush1.msra.mxu0 0.0
        %624 = vmatprep.subr.mxu0 0.0
        %625 = vmatpush1.msra.mxu0 0.0
        %626 = vmatprep.subr.mxu0 0.0
        %627 = vmatpush1.msra.mxu0 0.0
        %628 = vmatprep.subr.mxu0 0.0
        %629 = vmatpush1.msra.mxu0 0.0
        %630 = vmatprep.subr.mxu0 0.0
        %631 = vmatpush1.msra.mxu0 0.0
        %632 = vmatprep.subr.mxu0 0.0
        %633 = vmatpush1.msra.mxu0 0.0
        %634 = vmatprep.subr.mxu0 0.0
        %635 = vmatpush1.msra.mxu0 0.0
        %636 = vmatprep.subr.mxu0 0.0
        %637 = vmatpush1.msra.mxu0 0.0
        %638 = vmatprep.subr.mxu0 0.0
        %639 = vmatpush1.msra.mxu0 0.0
        %640 = vmatprep.subr.mxu0 0.0
        %641 = vmatpush1.msra.mxu0 0.0
        %642 = vmatprep.subr.mxu0 0.0
        %643 = vmatpush1.msra.mxu0 0.0
        %644 = vmatprep.subr.mxu0 0.0
        %645 = vmatpush1.msra.mxu0 0.0
        %646 = vmatprep.subr.mxu0 0.0
        %647 = vmatpush1.msra.mxu0 0.0
        %648 = vmatprep.subr.mxu0 0.0
        %649 = vmatpush1.msra.mxu0 0.0
        %650 = vmatprep.subr.mxu0 0.0
        %651 = vmatpush1.msra.mxu0 0.0
        %652 = vmatprep.mubr.f32.mxu0 0.0
        %653 = vmatmul.mubr.f32.gmra.mrb[0].mxu0 %v571
        %v654 = vpop.f32.mrb[0].mxu0
        %v655 = vadd.f32 0.0, %v654
        %v656 = vpop.f32.mrb[0].mxu0
        %657 = vdwg.mxu0
        %vm658 = vcmp.gt.f32.partialorder %v388, 0.0
        %v659 = vsel %vm658, %v655, -1e+30
        %vm660 = vcmask 64512
        %v661 = vsel %vm660, %v659, -inf
        %662 = vmax.xlane.f32.xlu0 %v661
        %v663 = vpop.xlane.xlu0 %662
        %v664 = vsub.f32 %v659, %v663
        %v665 = vmul.f32 %v664, 1.442695
        %v666 = vpow.pop %v665
        %v667 = vsel %vm660, %v666, 0.0
        %668 = vadd.xlane.f32.xlu0 %v667
        %v669 = vpop.xlane.xlu0 %668
        %v670 = vrcp.pop %v669
        %v671 = vmul.f32 %v666, %v670
        %v672 = vld [vmem:[%s5] sm:$0xf]
        %v673 = vld [vmem:[%s5 + $0x4] sm:$0xf]
        %v674 = vld [vmem:[%s5 + $0x8] sm:$0xf]
        %v675 = vld [vmem:[%s5 + $0xc] sm:$0xf]
        %v676 = vld [vmem:[%s5 + $0x10] sm:$0xf]
        %v677 = vld [vmem:[%s5 + $0x14] sm:$0xf]
        %v678 = vld [vmem:[%s5 + $0x18] sm:$0xf]
        %v679 = vld [vmem:[%s5 + $0x1c] sm:$0xf]
        %v680 = vld [vmem:[%s5 + $0x20] sm:$0xf]
        %v681 = vld [vmem:[%s5 + $0x24] sm:$0xf]
        %v682 = vld [vmem:[%s5 + $0x28] sm:$0xf]
        %v683 = vld [vmem:[%s5 + $0x2c] sm:$0xf]
        %v684 = vld [vmem:[%s5 + $0x30] sm:$0xf]
        %v685 = vld [vmem:[%s5 + $0x34] sm:$0xf]
        %v686 = vld [vmem:[%s5 + $0x38] sm:$0xf]
        %v687 = vld [vmem:[%s5 + $0x3c] sm:$0xf]
        %v688 = vld [vmem:[%s5 + $0x40] sm:$0xf]
        %v689 = vld [vmem:[%s5 + $0x44] sm:$0xf]
        %v690 = vld [vmem:[%s5 + $0x48] sm:$0xf]
        %v691 = vld [vmem:[%s5 + $0x4c] sm:$0xf]
        %v692 = vld [vmem:[%s5 + $0x50] sm:$0xf]
        %v693 = vld [vmem:[%s5 + $0x54] sm:$0xf]
        %v694 = vld [vmem:[%s5 + $0x58] sm:$0xf]
        %v695 = vld [vmem:[%s5 + $0x5c] sm:$0xf]
        %v696 = vld [vmem:[%s5 + $0x60] sm:$0xf]
        %v697 = vld [vmem:[%s5 + $0x64] sm:$0xf]
        %v698 = vld [vmem:[%s5 + $0x68] sm:$0xf]
        %v699 = vld [vmem:[%s5 + $0x6c] sm:$0xf]
        %v700 = vld [vmem:[%s5 + $0x70] sm:$0xf]
        %v701 = vld [vmem:[%s5 + $0x74] sm:$0xf]
        %v702 = vld [vmem:[%s5 + $0x78] sm:$0xf]
        %v703 = vld [vmem:[%s5 + $0x7c] sm:$0xf]
        %v736 = vunpack.c.l.b16 %v672
        %v737 = vunpack.c.l.b16 %v673
        %v738 = vunpack.c.l.b16 %v674
        %v739 = vunpack.c.l.b16 %v675
        %v740 = vunpack.c.l.b16 %v676
        %v741 = vunpack.c.l.b16 %v677
        %v742 = vunpack.c.l.b16 %v678
        %v743 = vunpack.c.l.b16 %v679
        %v744 = vunpack.c.l.b16 %v680
        %v745 = vunpack.c.l.b16 %v681
        %v746 = vunpack.c.l.b16 %v682
        %v747 = vunpack.c.l.b16 %v683
        %v748 = vunpack.c.l.b16 %v684
        %v749 = vunpack.c.l.b16 %v685
        %v750 = vunpack.c.l.b16 %v686
        %v751 = vunpack.c.l.b16 %v687
        %v752 = vunpack.c.l.b16 %v688
        %v753 = vunpack.c.l.b16 %v689
        %v754 = vunpack.c.l.b16 %v690
        %v755 = vunpack.c.l.b16 %v691
        %v756 = vunpack.c.l.b16 %v692
        %v757 = vunpack.c.l.b16 %v693
        %v758 = vunpack.c.l.b16 %v694
        %v759 = vunpack.c.l.b16 %v695
        %v760 = vunpack.c.l.b16 %v696
        %v761 = vunpack.c.l.b16 %v697
        %v762 = vunpack.c.l.b16 %v698
        %v763 = vunpack.c.l.b16 %v699
        %v764 = vunpack.c.l.b16 %v700
        %v765 = vunpack.c.l.b16 %v701
        %v766 = vunpack.c.l.b16 %v702
        %v767 = vunpack.c.l.b16 %v703
        %v768 = vpack.c.b16 %v737, %v736
        %v769 = vpack.c.b16 %v739, %v738
        %v770 = vpack.c.b16 %v741, %v740
        %v771 = vpack.c.b16 %v743, %v742
        %v772 = vpack.c.b16 %v745, %v744
        %v773 = vpack.c.b16 %v747, %v746
        %v774 = vpack.c.b16 %v749, %v748
        %v775 = vpack.c.b16 %v751, %v750
        %v776 = vpack.c.b16 %v753, %v752
        %v777 = vpack.c.b16 %v755, %v754
        %v778 = vpack.c.b16 %v757, %v756
        %v779 = vpack.c.b16 %v759, %v758
        %v780 = vpack.c.b16 %v761, %v760
        %v781 = vpack.c.b16 %v763, %v762
        %v782 = vpack.c.b16 %v765, %v764
        %v783 = vpack.c.b16 %v767, %v766
        %800 = vmatprep.subr.bf16.mxu0 0
        %801 = vmatpush1.bf16.msra.mxu0 %v768
        %802 = vmatprep.subr.bf16.mxu0 0
        %803 = vmatpush1.bf16.msra.mxu0 %v769
        %804 = vmatprep.subr.bf16.mxu0 0
        %805 = vmatpush1.bf16.msra.mxu0 %v770
        %806 = vmatprep.subr.bf16.mxu0 0
        %807 = vmatpush1.bf16.msra.mxu0 %v771
        %808 = vmatprep.subr.bf16.mxu0 0
        %809 = vmatpush1.bf16.msra.mxu0 %v772
        %810 = vmatprep.subr.bf16.mxu0 0
        %811 = vmatpush1.bf16.msra.mxu0 %v773
        %812 = vmatprep.subr.bf16.mxu0 0
        %813 = vmatpush1.bf16.msra.mxu0 %v774
        %814 = vmatprep.subr.bf16.mxu0 0
        %815 = vmatpush1.bf16.msra.mxu0 %v775
        %816 = vmatprep.subr.bf16.mxu0 0
        %817 = vmatpush1.bf16.msra.mxu0 %v776
        %818 = vmatprep.subr.bf16.mxu0 0
        %819 = vmatpush1.bf16.msra.mxu0 %v777
        %820 = vmatprep.subr.bf16.mxu0 0
        %821 = vmatpush1.bf16.msra.mxu0 %v778
        %822 = vmatprep.subr.bf16.mxu0 0
        %823 = vmatpush1.bf16.msra.mxu0 %v779
        %824 = vmatprep.subr.bf16.mxu0 0
        %825 = vmatpush1.bf16.msra.mxu0 %v780
        %826 = vmatprep.subr.bf16.mxu0 0
        %827 = vmatpush1.bf16.msra.mxu0 %v781
        %828 = vmatprep.subr.bf16.mxu0 0
        %829 = vmatpush1.bf16.msra.mxu0 %v782
        %830 = vmatprep.subr.bf16.mxu0 0
        %831 = vmatpush1.bf16.msra.mxu0 %v783
        %832 = vmatprep.mubr.bf16.mxu0 %v432
        %833 = vmatmul.mubr.bf16.gmra.mrb[0].mxu0 %v431
        %v834 = vpop.f32.mrb[0].mxu0
        %v835 = vadd.f32 0.0, %v834
        %v836 = vpop.f32.mrb[0].mxu0
        %v837 = vpop.f32.mrb[0].mxu0
        %v838 = vpop.f32.mrb[0].mxu0
        %839 = vdwg.mxu0
        %v840 = vld [vmem:[%s6] sm:$0xff]
        %v842 = vsel %vm660, %v671, 0
        %844 = vmatprep.subr.mxu0 0.0
        %845 = vmatpush1.msra.mxu0 %v840
        %846 = vmatprep.subr.mxu0 0.0
        %847 = vmatpush1.msra.mxu0 0.0
        %848 = vmatprep.subr.mxu0 0.0
        %849 = vmatpush1.msra.mxu0 0.0
        %850 = vmatprep.subr.mxu0 0.0
        %851 = vmatpush1.msra.mxu0 0.0
        %852 = vmatprep.subr.mxu0 0.0
        %853 = vmatpush1.msra.mxu0 0.0
        %854 = vmatprep.subr.mxu0 0.0
        %855 = vmatpush1.msra.mxu0 0.0
        %856 = vmatprep.subr.mxu0 0.0
        %857 = vmatpush1.msra.mxu0 0.0
        %858 = vmatprep.subr.mxu0 0.0
        %859 = vmatpush1.msra.mxu0 0.0
        %860 = vmatprep.subr.mxu0 0.0
        %861 = vmatpush1.msra.mxu0 0.0
        %862 = vmatprep.subr.mxu0 0.0
        %863 = vmatpush1.msra.mxu0 0.0
        %864 = vmatprep.subr.mxu0 0.0
        %865 = vmatpush1.msra.mxu0 0.0
        %866 = vmatprep.subr.mxu0 0.0
        %867 = vmatpush1.msra.mxu0 0.0
        %868 = vmatprep.subr.mxu0 0.0
        %869 = vmatpush1.msra.mxu0 0.0
        %870 = vmatprep.subr.mxu0 0.0
        %871 = vmatpush1.msra.mxu0 0.0
        %872 = vmatprep.subr.mxu0 0.0
        %873 = vmatpush1.msra.mxu0 0.0
        %874 = vmatprep.subr.mxu0 0.0
        %875 = vmatpush1.msra.mxu0 0.0
        %876 = vmatprep.subr.mxu0 0.0
        %877 = vmatpush1.msra.mxu0 0.0
        %878 = vmatprep.subr.mxu0 0.0
        %879 = vmatpush1.msra.mxu0 0.0
        %880 = vmatprep.subr.mxu0 0.0
        %881 = vmatpush1.msra.mxu0 0.0
        %882 = vmatprep.subr.mxu0 0.0
        %883 = vmatpush1.msra.mxu0 0.0
        %884 = vmatprep.subr.mxu0 0.0
        %885 = vmatpush1.msra.mxu0 0.0
        %886 = vmatprep.subr.mxu0 0.0
        %887 = vmatpush1.msra.mxu0 0.0
        %888 = vmatprep.subr.mxu0 0.0
        %889 = vmatpush1.msra.mxu0 0.0
        %890 = vmatprep.subr.mxu0 0.0
        %891 = vmatpush1.msra.mxu0 0.0
        %892 = vmatprep.subr.mxu0 0.0
        %893 = vmatpush1.msra.mxu0 0.0
        %894 = vmatprep.subr.mxu0 0.0
        %895 = vmatpush1.msra.mxu0 0.0
        %896 = vmatprep.subr.mxu0 0.0
        %897 = vmatpush1.msra.mxu0 0.0
        %898 = vmatprep.subr.mxu0 0.0
        %899 = vmatpush1.msra.mxu0 0.0
        %900 = vmatprep.subr.mxu0 0.0
        %901 = vmatpush1.msra.mxu0 0.0
        %902 = vmatprep.subr.mxu0 0.0
        %903 = vmatpush1.msra.mxu0 0.0
        %904 = vmatprep.subr.mxu0 0.0
        %905 = vmatpush1.msra.mxu0 0.0
        %906 = vmatprep.subr.mxu0 0.0
        %907 = vmatpush1.msra.mxu0 0.0
        %908 = vmatprep.mubr.f32.mxu0 0.0
        %909 = vmatmul.mubr.f32.gmra.mrb[0].mxu0 %v842
        %v910 = vpop.f32.mrb[0].mxu0
        %v911 = vadd.f32 0.0, %v910
        %v912 = vpop.f32.mrb[0].mxu0
        %913 = vdwg.mxu0
        %v914 = vmul.f32 %v911, %v835
        %v915 = vld [vmem:[%s7] sm:$0xff]
        %v916 = vld [vmem:[%s7 + $0x8] sm:$0xff]
        %v917 = vld [vmem:[%s7 + $0x10] sm:$0xff]
        %v918 = vld [vmem:[%s7 + $0x18] sm:$0xff]
        %v919 = vld [vmem:[%s7 + $0x20] sm:$0xff]
        %v920 = vld [vmem:[%s7 + $0x28] sm:$0xff]
        %v921 = vld [vmem:[%s7 + $0x30] sm:$0xff]
        %v922 = vld [vmem:[%s7 + $0x38] sm:$0xff]
        %v923 = vld [vmem:[%s7 + $0x40] sm:$0xff]
        %v924 = vld [vmem:[%s7 + $0x48] sm:$0xff]
        %v925 = vld [vmem:[%s7 + $0x50] sm:$0xff]
        %v926 = vld [vmem:[%s7 + $0x58] sm:$0xff]
        %v927 = vld [vmem:[%s7 + $0x60] sm:$0xff]
        %v928 = vld [vmem:[%s7 + $0x68] sm:$0xff]
        %v929 = vld [vmem:[%s7 + $0x70] sm:$0xff]
        %v930 = vld [vmem:[%s7 + $0x78] sm:$0xff]
        %v931 = vld [vmem:[%s8] sm:$0x1]
        %v933 = vlaneseq
        %v934 = vshrl.u32 %v933, 7
        %v935 = vsub.s32 0, %v934
        %v936 = vrot.slane %v931, %v935
        %938 = vmatprep.subr.mxu0 0.0
        %939 = vmatpush1.msra.mxu0 %v915
        %940 = vmatprep.subr.mxu0 0.0
        %941 = vmatpush1.msra.mxu0 %v916
        %942 = vmatprep.subr.mxu0 0.0
        %943 = vmatpush1.msra.mxu0 %v917
        %944 = vmatprep.subr.mxu0 0.0
        %945 = vmatpush1.msra.mxu0 %v918
        %946 = vmatprep.subr.mxu0 0.0
        %947 = vmatpush1.msra.mxu0 %v919
        %948 = vmatprep.subr.mxu0 0.0
        %949 = vmatpush1.msra.mxu0 %v920
        %950 = vmatprep.subr.mxu0 0.0
        %951 = vmatpush1.msra.mxu0 %v921
        %952 = vmatprep.subr.mxu0 0.0
        %953 = vmatpush1.msra.mxu0 %v922
        %954 = vmatprep.subr.mxu0 0.0
        %955 = vmatpush1.msra.mxu0 %v923
        %956 = vmatprep.subr.mxu0 0.0
        %957 = vmatpush1.msra.mxu0 %v924
        %958 = vmatprep.subr.mxu0 0.0
        %959 = vmatpush1.msra.mxu0 %v925
        %960 = vmatprep.subr.mxu0 0.0
        %961 = vmatpush1.msra.mxu0 %v926
        %962 = vmatprep.subr.mxu0 0.0
        %963 = vmatpush1.msra.mxu0 %v927
        %964 = vmatprep.subr.mxu0 0.0
        %965 = vmatpush1.msra.mxu0 %v928
        %966 = vmatprep.subr.mxu0 0.0
        %967 = vmatpush1.msra.mxu0 %v929
        %968 = vmatprep.subr.mxu0 0.0
        %969 = vmatpush1.msra.mxu0 %v930
        %970 = vmatprep.subr.mxu0 0.0
        %971 = vmatpush1.msra.mxu0 0.0
        %972 = vmatprep.subr.mxu0 0.0
        %973 = vmatpush1.msra.mxu0 0.0
        %974 = vmatprep.subr.mxu0 0.0
        %975 = vmatpush1.msra.mxu0 0.0
        %976 = vmatprep.subr.mxu0 0.0
        %977 = vmatpush1.msra.mxu0 0.0
        %978 = vmatprep.subr.mxu0 0.0
        %979 = vmatpush1.msra.mxu0 0.0
        %980 = vmatprep.subr.mxu0 0.0
        %981 = vmatpush1.msra.mxu0 0.0
        %982 = vmatprep.subr.mxu0 0.0
        %983 = vmatpush1.msra.mxu0 0.0
        %984 = vmatprep.subr.mxu0 0.0
        %985 = vmatpush1.msra.mxu0 0.0
        %986 = vmatprep.subr.mxu0 0.0
        %987 = vmatpush1.msra.mxu0 0.0
        %988 = vmatprep.subr.mxu0 0.0
        %989 = vmatpush1.msra.mxu0 0.0
        %990 = vmatprep.subr.mxu0 0.0
        %991 = vmatpush1.msra.mxu0 0.0
        %992 = vmatprep.subr.mxu0 0.0
        %993 = vmatpush1.msra.mxu0 0.0
        %994 = vmatprep.subr.mxu0 0.0
        %995 = vmatpush1.msra.mxu0 0.0
        %996 = vmatprep.subr.mxu0 0.0
        %997 = vmatpush1.msra.mxu0 0.0
        %998 = vmatprep.subr.mxu0 0.0
        %999 = vmatpush1.msra.mxu0 0.0
        %1000 = vmatprep.subr.mxu0 0.0
        %1001 = vmatpush1.msra.mxu0 0.0
        %1002 = vmatprep.mubr.f32.mxu0 0.0
        %1003 = vmatmul.mubr.f32.gmra.mrb[0].mxu0 %v914
        %v1004 = vpop.f32.mrb[0].mxu0
        %v1005 = vadd.f32 %v936, %v1004
        %v1006 = vpop.f32.mrb[0].mxu0
        %1007 = vdwg.mxu0
        %1009 = vrot.lane.b32.xlu0 %v388, 8
        %v1010 = vpop.permute.xlu0 %1009
        %vm1012 = vcmask 130048
        %v1013 = vsel %vm1012, %v1005, %v1010
        %vm1014 = vcmask 261120
        %1015 = vst.msk [vmem:[%s385] sm:$0xff] %vm1014, %v1013
        %s1016 = sand.u32 %s236, 1
        %s1017 = scalar_lea.sflag [#allocation4], %s1016
        %s1018 = sand.u32 %s236, 1
        %s1019 = smul.addr %s1018, 8
        %s1020 = scalar_lea.vmem [#allocation7], %s1019
        // Predicated region
        $region65: #{tpu_custom_call.1} parent=55 // pred_check
          %p1021 = pneg %p246
        $region66: #{tpu_custom_call.1} parent=55 // pred_check_branch
          %1023 = sbr.rel (%p1021) target = $region68
        $region67: #{tpu_custom_call.1} parent=55 // pred_region
          %s1025 = ssub.s32 128, 128
          %1026 = vsyncadd %s1017, %s1025
          %s1027 = smul.addr %s29, 128
          %s1028 = scalar_lea.hbm %s9, %s1027
          %s1030 = sshll.u32 %s1020, 4
          %s1031 = int_to_ptr.vmem [resolvable:$true] %s1030
          %1033 = dma.vmem_to_hbm [thread:$0]  %s1031, 128, %s1028, %s1017
        $region68: #{tpu_custom_call.1} parent=55 // pred_fallthru
          _
      $region56: #{tpu_custom_call.1} parent=5 // pred_fallthru
        _
      %p1034 = scmp.le.s32.totalorder 2, %s24
      // Predicated region
      $region69: #{tpu_custom_call.1} parent=5 // pred_check
        %p1035 = pneg %p1034
      $region70: #{tpu_custom_call.1} parent=5 // pred_check_branch
        %1037 = sbr.rel (%p1035) target = $region72
      $region71: #{tpu_custom_call.1} parent=5 // pred_region
        %s1038 = ssub.s32 %s24, 2
        // Predicated region
        $region73: #{tpu_custom_call.1} parent=71 // pred_check
          %p1039 = pneg %p252
        $region74: #{tpu_custom_call.1} parent=71 // pred_check_branch
          %1041 = sbr.rel (%p1039) target = $region76
        $region75: #{tpu_custom_call.1} parent=71 // pred_region
          %s1042 = sand.u32 %s237, 1
          %s1043 = scalar_lea.sflag [#allocation4], %s1042
          %s1044 = sand.u32 %s237, 1
          %s1045 = smul.addr %s1044, 8
          %s1046 = scalar_lea.vmem [#allocation7], %s1045
          %1047 = dma.done %s1043, 128
        $region76: #{tpu_custom_call.1} parent=71 // pred_fallthru
          _
      $region72: #{tpu_custom_call.1} parent=5 // pred_fallthru
        _
    $region6: #{tpu_custom_call.1} parent=1 // loop_footer
      %s28 = sadd.s32 1, %s24
    $region7: #{tpu_custom_call.1} parent=1 // loop_footer_branch
      %23 = sbr.rel target = $region3
    $region8: #{tpu_custom_call.1} parent=1 // loop_exit
      _
    %1048 = vsyncpa [#allocation3], 1
    %s1049 = scalar_lea.sflag [#allocation3], 1
    %1050 = vsyncpa %s1049, 1
    %1051 = vsyncpa [#allocation6], 1
    %s1052 = scalar_lea.sflag [#allocation6], 1
    %1053 = vsyncpa %s1052, 1
    %1054 = vsyncpa [#allocation4], 1
    %s1055 = scalar_lea.sflag [#allocation4], 1
    %1056 = vsyncpa %s1055, 1

</llo_original>
